<compile_context>
chip_gen: v5e
topology: v5e:2x2
jax: 0.10.0
libtpu: 0.0.40
codegen_flags: <defaults>
</compile_context>

<pallas_src>
import functools

import jax
import jax.numpy as jnp
from jax import lax
from jax.experimental import pallas as pl
from jax.experimental.pallas import tpu as pltpu

_LANES = 128
_NEG_BIG = -1e30          # large finite negative (avoids inf-inf NaNs)


def _round_up(x, m):
    return ((x + m - 1) // m) * m


def _rep_lanes(x, n):
    """Replicate a lane-dense (rows, 128) block n times along lanes -> (rows, 128*n)."""
    return x if n == 1 else jnp.concatenate([x] * n, axis=1)


def _contrastive_kernel(q_ref, kt_ref, lab_row_ref, lab_col_ref, bias_ref, cnt_ref,
                        out_ref, m_ref, l_ref, swl_ref,
                        *, inv_temp, loss_scale, batch, tm, tn, kt_resident):
    i = pl.program_id(0)                 # query-row block        ("parallel")
    j = pl.program_id(1)                 # key-column block       ("arbitrary", reduction)
    nj = pl.num_programs(1)
    reps = tn // _LANES

    @pl.when(j == 0)
    def _init():
        m_ref[...] = jnp.full_like(m_ref, _NEG_BIG)
        l_ref[...] = jnp.zeros_like(l_ref)
        swl_ref[...] = jnp.zeros_like(swl_ref)

    if kt_resident:
        kt_tile = kt_ref[j]              # (d_pad, tn), keys resident in VMEM
    else:
        kt_tile = kt_ref[...]            # (d_pad, tn), streamed per column block

    # MXU: bf16 operands, f32 accumulation.
    sim = jnp.dot(q_ref[...], kt_tile, preferred_element_type=jnp.float32)
    # Column bias is 0 for valid key columns and -1e30 for padded ones, so the
    # hot loop needs no iota/compare masking at all.
    logits = sim * inv_temp + bias_ref[...]                       # (tm, tn) f32

    # ---- online softmax statistics (lane-dense (tm, 128) accumulators) ----
    m_prev = m_ref[...]                                           # (tm, 128)
    l_prev = l_ref[...]
    m_curr = jnp.max(logits, axis=1)[:, None]                     # (tm, 1)
    m_next = jnp.maximum(m_prev, m_curr)                          # (tm, 128)
    alpha = jnp.exp(m_prev - m_next)
    p = jnp.exp(logits - _rep_lanes(m_next, reps))                # (tm, tn)
    l_curr = lax.broadcast_in_dim(jnp.sum(p, axis=1), m_prev.shape, (0,))
    l_ref[...] = alpha * l_prev + l_curr
    m_ref[...] = m_next

    # ---- positive-pair logit sum (shift-free; diagonal removed below) ----
    pos = lab_row_ref[...] == lab_col_ref[...]                    # (tm, tn) bool
    swl_curr = jnp.sum(jnp.where(pos, logits, 0.0), axis=1)
    swl_ref[...] += lax.broadcast_in_dim(swl_curr, m_prev.shape, (0,))

    # Only the tile(s) overlapping the global diagonal remove the self-pair;
    # interior tiles skip this branch entirely.
    row0 = i * tm
    col0 = j * tn
    contains_diag = jnp.logical_and(col0 < row0 + tm, row0 < col0 + tn)

    @pl.when(contains_diag)
    def _remove_diag():
        row_g = row0 + lax.broadcasted_iota(jnp.int32, (tm, tn), 0)
        col_g = col0 + lax.broadcasted_iota(jnp.int32, (tm, tn), 1)
        is_diag = row_g == col_g
        diag_p = jnp.sum(jnp.where(is_diag, p, 0.0), axis=1)            # exp-sum part
        diag_lg = jnp.sum(jnp.where(is_diag & pos, logits, 0.0), axis=1)  # swl part
        l_ref[...] -= lax.broadcast_in_dim(diag_p, m_prev.shape, (0,))
        swl_ref[...] -= lax.broadcast_in_dim(diag_lg, m_prev.shape, (0,))

    # ---- finalize once per row block (off the hot loop) ----
    @pl.when(j == nj - 1)
    def _finalize():
        cnt = cnt_ref[...]                                        # (tm, 1) f32
        m_fin = m_ref[...][:, :1]
        l_fin = l_ref[...][:, :1]
        swl_fin = swl_ref[...][:, :1]
        log_denom = m_fin + jnp.log(l_fin + 1e-12)
        # sum(mask*log_prob) = sum(mask*logits) - cnt*(max + log(sum_exp + eps))
        mean_log_prob_pos = (swl_fin - cnt * log_denom) / (cnt + 1e-12)   # exact divide
        row_valid = (row0 + lax.broadcasted_iota(jnp.int32, (tm, 1), 0)) < batch
        out_ref[...] = jnp.where(row_valid, -loss_scale * mean_log_prob_pos, 0.0)


def _choose_tiles(b, d_pad, tm_target, tn_target):
    """Pick (tm, tn): tm a multiple of tn, both lane-aligned, VMEM-safe."""
    tn = max(_LANES, min(int(tn_target), _round_up(b, _LANES)))
    tm = max(int(tm_target), tn)
    tm = (tm // tn) * tn
    tm = min(tm, _round_up(b, tn))
    # v7x megacore: prefer >= 2 row blocks when the batch allows it.
    n_tn_blocks = _round_up(b, tn) // tn
    if tm > tn and _round_up(b, tm) // tm < 2 and n_tn_blocks >= 2:
        tm = max(tn, ((n_tn_blocks + 1) // 2) * tn)
    # VMEM guard: keep double-buffered q/kt tiles + f32 temps ~<= 40 MiB so the
    # pipeline survives on v7x (64 MiB physical VMEM).
    def est(tm_, tn_):
        return 2 * tm_ * d_pad * 2 + 2 * tn_ * d_pad * 2 + 8 * tm_ * tn_ * 4
    while tm > tn and est(tm, tn) > 40 * 1024 * 1024:
        tm -= tn
    return tm, tn


def simple_contrastive_loss(features, labels, temperature=0.1, base_temperature=0.1,
                            tm=512, tn=256, resident_kt_max_bytes=8 * 1024 * 1024):
    """features: [B, D] (L2-normalized), labels: [B] int. Returns scalar f32.

    tm/tn: query-row / key-column tile targets. Defaults (512, 256) suit v5e,
    v6e and v7x; they are shrunk automatically for small batches or huge D.
    """
    features = jnp.asarray(features)
    labels = jnp.asarray(labels).reshape(-1).astype(jnp.int32)
    b, d = features.shape
    if b <= 1:
        return jnp.float32(0.0)

    d_pad = _round_up(d, _LANES)
    tm, tn = _choose_tiles(b, d_pad, tm, tn)
    b_pad = _round_up(b, tm)                     # multiple of both tm and tn
    n_i, n_j = b_pad // tm, b_pad // tn

    # bf16 operands for the MXU; cast BEFORE padding/transposing (halves the
    # one-time wrapper-side traffic of building the key operand).
    f_bf = features.astype(jnp.bfloat16)
    f_pad = jnp.pad(f_bf, ((0, b_pad - b), (0, d_pad - d)))
    q = f_pad                                    # (b_pad, d_pad)
    kt = f_pad.T                                 # (d_pad, b_pad), transposed once

    kt_bytes = kt.size * 2
    kt_resident = kt_bytes <= int(resident_kt_max_bytes)
    if kt_resident:
        # Keys DMA'd into VMEM exactly once; sliced per column block in-kernel.
        kt_arr = kt.reshape(d_pad, n_j, tn).transpose(1, 0, 2)   # (n_j, d_pad, tn)
        kt_spec = pl.BlockSpec((n_j, d_pad, tn), lambda i, j: (0, 0, 0))
    else:
        kt_arr = kt
        kt_spec = pl.BlockSpec((d_pad, tn), lambda i, j: (0, j))

    pad_b = b_pad - b
    smin = jnp.min(labels)
    # Distinct sentinels for padded rows vs padded columns -> padded entries can
    # never form a "positive" pair with anything (real or padded).
    lab_row = jnp.concatenate(
        [labels, jnp.full((pad_b,), smin - 2, jnp.int32)]).reshape(b_pad, 1)
    lab_col = jnp.concatenate(
        [labels, jnp.full((pad_b,), smin - 1, jnp.int32)]).reshape(1, b_pad)
    col_bias = jnp.where(jnp.arange(b_pad) < b, 0.0, _NEG_BIG
                         ).astype(jnp.float32).reshape(1, b_pad)
    # Positives per row (excluding self), precomputed once outside the kernel.
    cnt = ((labels[:, None] == labels[None, :]).sum(axis=1) - 1).astype(jnp.float32)
    cnt = jnp.pad(cnt, (0, pad_b)).reshape(b_pad, 1)

    kernel = functools.partial(
        _contrastive_kernel,
        inv_temp=float(1.0 / temperature),
        loss_scale=float(temperature / base_temperature),
        batch=int(b), tm=tm, tn=tn, kt_resident=kt_resident)

    # Explicit VMEM budget (conservative: everything double-buffered + temps).
    kt_vmem = 2 * (kt_bytes if kt_resident else d_pad * tn * 2)
    est_vmem = (2 * tm * d_pad * 2 + kt_vmem + 8 * tm * tn * 4
                + 3 * tm * _LANES * 4 + 8 * (tm + tn) * 4)
    vmem_limit = int(min(64 * 1024 * 1024, max(32 * 1024 * 1024, est_vmem + (4 << 20))))

    bytes_accessed = (b_pad * d_pad * 2                                  # q (read once)
                      + (1 if kt_resident else n_i) * b_pad * d_pad * 2  # kt re-reads
                      + n_i * b_pad * 8                                  # col labels/bias
                      + b_pad * 12)                                      # row labels/cnt/out

    row_losses = pl.pallas_call(
        kernel,
        out_shape=jax.ShapeDtypeStruct((b_pad, 1), jnp.float32),
        grid_spec=pltpu.PrefetchScalarGridSpec(
            num_scalar_prefetch=0,
            grid=(n_i, n_j),
            in_specs=[
                pl.BlockSpec((tm, d_pad), lambda i, j: (i, 0)),   # query rows
                kt_spec,                                          # keys
                pl.BlockSpec((tm, 1), lambda i, j: (i, 0)),       # row labels
                pl.BlockSpec((1, tn), lambda i, j: (0, j)),       # col labels
                pl.BlockSpec((1, tn), lambda i, j: (0, j)),       # col pad bias
                pl.BlockSpec((tm, 1), lambda i, j: (i, 0)),       # positives per row
            ],
            out_specs=pl.BlockSpec((tm, 1), lambda i, j: (i, 0)),
            scratch_shapes=[pltpu.VMEM((tm, _LANES), jnp.float32)
                            for _ in range(3)],                   # m, l, sum(pos*logits)
        ),
        compiler_params=pltpu.CompilerParams(
            dimension_semantics=("parallel", "arbitrary"),
            vmem_limit_bytes=vmem_limit),
        cost_estimate=pl.CostEstimate(
            flops=2 * b_pad * b_pad * d_pad,
            transcendentals=b_pad * b_pad + n_i * n_j * tm * _LANES,
            bytes_accessed=int(bytes_accessed)),
    )(q, kt_arr, lab_row, lab_col, col_bias, cnt)

    return jnp.sum(row_losses) / jnp.float32(b)


def _reference_loss(features, labels, temperature=0.1, base_temperature=0.1,
                    matmul_dtype=jnp.float32):
    """Pure-JAX mirror of the PyTorch forward (optionally bf16 matmul inputs)."""
    b = features.shape[0]
    fm = features.astype(matmul_dtype)
    sim = jnp.dot(fm, fm.T, preferred_element_type=jnp.float32)
    lab = labels.reshape(-1, 1)
    mask = (lab == lab.T).astype(jnp.float32)
    logits_mask = 1.0 - jnp.eye(b, dtype=jnp.float32)
    mask = mask * logits_mask
    logits = sim / temperature
    logits = logits - jnp.max(logits, axis=1, keepdims=True)
    exp_logits = jnp.exp(logits) * logits_mask
    log_prob = logits - jnp.log(exp_logits.sum(1, keepdims=True) + 1e-12)
    mean_log_prob_pos = (mask * log_prob).sum(1) / (mask.sum(1) + 1e-12)
    loss = -(temperature / base_temperature) * mean_log_prob_pos
    return loss.mean()


if __name__ == "__main__":
    key = jax.random.PRNGKey(0)

    def _check(B, D, n_classes, **kw):
        kf, kl = jax.random.split(jax.random.fold_in(key, B * 1000 + D))
        feats = jax.random.normal(kf, (B, D), dtype=jnp.float32)
        feats = feats / jnp.linalg.norm(feats, axis=1, keepdims=True)   # L2 normalize
        labels = jax.random.randint(kl, (B,), 0, n_classes, dtype=jnp.int32)

        loss = simple_contrastive_loss(feats, labels, 0.1, 0.1, **kw)
        loss = jax.block_until_ready(loss)

        # Tight check vs a bf16-matmul-matched reference (kernel arithmetic),
        # loose check vs the f32 PyTorch-equivalent reference (semantics).
        ref_bf16 = _reference_loss(feats, labels, 0.1, 0.1, matmul_dtype=jnp.bfloat16)
        ref_f32 = _reference_loss(feats, labels, 0.1, 0.1)
        assert jnp.allclose(loss, ref_bf16, atol=1e-2, rtol=1e-2), (B, D, kw, loss, ref_bf16)
        assert jnp.allclose(loss, ref_f32, atol=5e-2, rtol=5e-2), (B, D, kw, loss, ref_f32)

    # Small shape implied by the module (single 128x128 tile, resident keys).
    _check(B=8, D=32, n_classes=3)
    # Multi-block grid (2x2): online-softmax accumulation, padded rows/columns.
    _check(B=200, D=40, n_classes=5, tm=128, tn=128)
    # TM != TN: the diagonal spans two column blocks per row block.
    _check(B=300, D=72, n_classes=4, tm=256, tn=128)
    # Streaming (non-VMEM-resident) key path.
    _check(B=200, D=40, n_classes=5, tm=128, tn=128, resident_kt_max_bytes=0)

    print("KERNEL_OK")
</pallas_src>

<mosaic_0001>
module attributes {stable_mosaic.version = 11 : i64} {
  func.func @_contrastive_kernel(%arg0: i32, %arg1: i32, %arg2: memref<128x128xbf16, #tpu.memory_space<vmem>>, %arg3: memref<1x128x128xbf16, #tpu.memory_space<vmem>>, %arg4: memref<128x1xi32, #tpu.memory_space<vmem>>, %arg5: memref<1x128xi32, #tpu.memory_space<vmem>>, %arg6: memref<1x128xf32, #tpu.memory_space<vmem>>, %arg7: memref<128x1xf32, #tpu.memory_space<vmem>>, %arg8: memref<128x1xf32, #tpu.memory_space<vmem>>, %arg9: memref<128x128xf32, #tpu.memory_space<vmem>>, %arg10: memref<128x128xf32, #tpu.memory_space<vmem>>, %arg11: memref<128x128xf32, #tpu.memory_space<vmem>>) attributes {dimension_semantics = [#tpu.dimension_semantics<parallel>, #tpu.dimension_semantics<arbitrary>], iteration_bounds = array<i64: 1, 1>, scalar_prefetch = 0 : i64, scratch_operands = 3 : i64, tpu.core_type = #tpu.core_type<tc>, window_params = [{transform_indices = @transform_0, window_bounds = array<i64: 128, 128>}, {pipeline_mode = #tpu.pipeline_mode<synchronous>, transform_indices = @transform_1, window_bounds = array<i64: 1, 128, 128>}, {transform_indices = @transform_2, window_bounds = array<i64: 128, 1>}, {transform_indices = @transform_3, window_bounds = array<i64: 1, 128>}, {transform_indices = @transform_4, window_bounds = array<i64: 1, 128>}, {transform_indices = @transform_5, window_bounds = array<i64: 128, 1>}, {transform_indices = @transform_6, window_bounds = array<i64: 128, 1>}]} {
    %c0_i32 = arith.constant 0 : i32
    %0 = arith.cmpi eq, %arg1, %c0_i32 : i32
    %1 = arith.extui %0 : i1 to i32
    %c0_i32_0 = arith.constant 0 : i32
    %2 = arith.cmpi ne, %1, %c0_i32_0 : i32
    scf.if %2 {
      %cst_33 = arith.constant -1.000000e+30 : f32
      %55 = vector.broadcast %cst_33 : f32 to vector<128x128xf32>
      %c0_34 = arith.constant 0 : index
      %c0_35 = arith.constant 0 : index
      %56 = vector.load %arg9[%c0_34, %c0_35] : memref<128x128xf32, #tpu.memory_space<vmem>>, vector<128x128xf32>
      tpu.vector_store %arg9[%c0_34, %c0_35], %55 {strides = array<i32>} : memref<128x128xf32, #tpu.memory_space<vmem>>, vector<128x128xf32>,
      %cst_36 = arith.constant 0.000000e+00 : f32
      %57 = vector.broadcast %cst_36 : f32 to vector<128x128xf32>
      %c0_37 = arith.constant 0 : index
      %c0_38 = arith.constant 0 : index
      %58 = vector.load %arg10[%c0_37, %c0_38] : memref<128x128xf32, #tpu.memory_space<vmem>>, vector<128x128xf32>
      tpu.vector_store %arg10[%c0_37, %c0_38], %57 {strides = array<i32>} : memref<128x128xf32, #tpu.memory_space<vmem>>, vector<128x128xf32>,
      %cst_39 = arith.constant 0.000000e+00 : f32
      %59 = vector.broadcast %cst_39 : f32 to vector<128x128xf32>
      %c0_40 = arith.constant 0 : index
      %c0_41 = arith.constant 0 : index
      %60 = vector.load %arg11[%c0_40, %c0_41] : memref<128x128xf32, #tpu.memory_space<vmem>>, vector<128x128xf32>
      tpu.vector_store %arg11[%c0_40, %c0_41], %59 {strides = array<i32>} : memref<128x128xf32, #tpu.memory_space<vmem>>, vector<128x128xf32>,
    } else {
    }
    %3 = arith.index_cast %arg1 : i32 to index
    %c0 = arith.constant 0 : index
    %c0_1 = arith.constant 0 : index
    %4 = vector.load %arg3[%3, %c0, %c0_1] : memref<1x128x128xbf16, #tpu.memory_space<vmem>>, vector<1x128x128xbf16>
    %5 = vector.shape_cast %4 : vector<1x128x128xbf16> to vector<128x128xbf16>
    %c0_2 = arith.constant 0 : index
    %c0_3 = arith.constant 0 : index
    %6 = vector.load %arg2[%c0_2, %c0_3] : memref<128x128xbf16, #tpu.memory_space<vmem>>, vector<128x128xbf16>
    %cst = arith.constant dense<0.000000e+00> : vector<128x128xf32>
    %7 = tpu.matmul %6, %5, %cst {dimension_numbers = #tpu.dot_dimension_numbers<[1], [0], [0], [1], [0, 0, 1, 1], [], []>} : vector<128x128xbf16>, vector<128x128xbf16>, vector<128x128xf32> -> vector<128x128xf32>
    %cst_4 = arith.constant 1.000000e+01 : f32
    %8 = vector.broadcast %cst_4 : f32 to vector<128x128xf32>
    %9 = arith.mulf %7, %8 : vector<128x128xf32>
    %c0_5 = arith.constant 0 : index
    %c0_6 = arith.constant 0 : index
    %10 = vector.load %arg6[%c0_5, %c0_6] : memref<1x128xf32, #tpu.memory_space<vmem>>, vector<1x128xf32>
    %11 = vector.broadcast %10 : vector<1x128xf32> to vector<128x128xf32>
    %12 = arith.addf %9, %11 : vector<128x128xf32>
    %c0_7 = arith.constant 0 : index
    %c0_8 = arith.constant 0 : index
    %13 = vector.load %arg9[%c0_7, %c0_8] : memref<128x128xf32, #tpu.memory_space<vmem>>, vector<128x128xf32>
    %c0_9 = arith.constant 0 : index
    %c0_10 = arith.constant 0 : index
    %14 = vector.load %arg10[%c0_9, %c0_10] : memref<128x128xf32, #tpu.memory_space<vmem>>, vector<128x128xf32>
    %cst_11 = arith.constant dense<0xFF800000> : vector<128xf32>
    %15 = vector.multi_reduction <maximumf>, %12, %cst_11 [1] : vector<128x128xf32> to vector<128xf32>
    %16 = vector.shape_cast %15 : vector<128xf32> to vector<128x1xf32>
    %17 = vector.broadcast %16 : vector<128x1xf32> to vector<128x128xf32>
    %18 = arith.maximumf %13, %17 : vector<128x128xf32>
    %19 = arith.subf %13, %18 : vector<128x128xf32>
    %20 = math.exp %19 : vector<128x128xf32>
    %21 = arith.subf %12, %18 : vector<128x128xf32>
    %22 = math.exp %21 : vector<128x128xf32>
    %cst_12 = arith.constant dense<0.000000e+00> : vector<128xf32>
    %23 = vector.multi_reduction <add>, %22, %cst_12 [1] : vector<128x128xf32> to vector<128xf32>
    %24 = vector.shape_cast %23 : vector<128xf32> to vector<128x1xf32>
    %25 = vector.broadcast %24 : vector<128x1xf32> to vector<128x128xf32>
    %26 = arith.mulf %20, %14 : vector<128x128xf32>
    %27 = arith.addf %26, %25 : vector<128x128xf32>
    %c0_13 = arith.constant 0 : index
    %c0_14 = arith.constant 0 : index
    %28 = vector.load %arg10[%c0_13, %c0_14] : memref<128x128xf32, #tpu.memory_space<vmem>>, vector<128x128xf32>
    tpu.vector_store %arg10[%c0_13, %c0_14], %27 {strides = array<i32>} : memref<128x128xf32, #tpu.memory_space<vmem>>, vector<128x128xf32>,
    %c0_15 = arith.constant 0 : index
    %c0_16 = arith.constant 0 : index
    %29 = vector.load %arg9[%c0_15, %c0_16] : memref<128x128xf32, #tpu.memory_space<vmem>>, vector<128x128xf32>
    tpu.vector_store %arg9[%c0_15, %c0_16], %18 {strides = array<i32>} : memref<128x128xf32, #tpu.memory_space<vmem>>, vector<128x128xf32>,
    %c0_17 = arith.constant 0 : index
    %c0_18 = arith.constant 0 : index
    %30 = vector.load %arg4[%c0_17, %c0_18] : memref<128x1xi32, #tpu.memory_space<vmem>>, vector<128x1xi32>
    %c0_19 = arith.constant 0 : index
    %c0_20 = arith.constant 0 : index
    %31 = vector.load %arg5[%c0_19, %c0_20] : memref<1x128xi32, #tpu.memory_space<vmem>>, vector<1x128xi32>
    %32 = vector.broadcast %30 : vector<128x1xi32> to vector<128x128xi32>
    %33 = vector.broadcast %31 : vector<1x128xi32> to vector<128x128xi32>
    %34 = arith.cmpi eq, %32, %33 : vector<128x128xi32>
    %cst_21 = arith.constant 0.000000e+00 : f32
    %35 = vector.broadcast %cst_21 : f32 to vector<128x128xf32>
    %36 = arith.select %34, %12, %35 : vector<128x128xi1>, vector<128x128xf32>
    %cst_22 = arith.constant dense<0.000000e+00> : vector<128xf32>
    %37 = vector.multi_reduction <add>, %36, %cst_22 [1] : vector<128x128xf32> to vector<128xf32>
    %c0_23 = arith.constant 0 : index
    %c0_24 = arith.constant 0 : index
    %38 = vector.load %arg11[%c0_23, %c0_24] : memref<128x128xf32, #tpu.memory_space<vmem>>, vector<128x128xf32>
    %39 = vector.shape_cast %37 : vector<128xf32> to vector<128x1xf32>
    %40 = vector.broadcast %39 : vector<128x1xf32> to vector<128x128xf32>
    %41 = arith.addf %38, %40 : vector<128x128xf32>
    %c0_25 = arith.constant 0 : index
    %c0_26 = arith.constant 0 : index
    %42 = vector.load %arg11[%c0_25, %c0_26] : memref<128x128xf32, #tpu.memory_space<vmem>>, vector<128x128xf32>
    tpu.vector_store %arg11[%c0_25, %c0_26], %41 {strides = array<i32>} : memref<128x128xf32, #tpu.memory_space<vmem>>, vector<128x128xf32>,
    %c128_i32 = arith.constant 128 : i32
    %43 = arith.muli %arg0, %c128_i32 : i32
    %c128_i32_27 = arith.constant 128 : i32
    %44 = arith.muli %arg1, %c128_i32_27 : i32
    %c128_i32_28 = arith.constant 128 : i32
    %45 = arith.addi %43, %c128_i32_28 : i32
    %46 = arith.cmpi slt, %44, %45 : i32
    %c128_i32_29 = arith.constant 128 : i32
    %47 = arith.addi %44, %c128_i32_29 : i32
    %48 = arith.cmpi slt, %43, %47 : i32
    %49 = arith.andi %46, %48 : i1
    %50 = arith.extui %49 : i1 to i32
    %c0_i32_30 = arith.constant 0 : i32
    %51 = arith.cmpi ne, %50, %c0_i32_30 : i32
    scf.if %51 {
      %55 = tpu.iota {dimensions = array<i32: 0>} : vector<128x128xi32>
      %56 = vector.broadcast %43 : i32 to vector<128x128xi32>
      %57 = arith.addi %56, %55 : vector<128x128xi32>
      %58 = tpu.iota {dimensions = array<i32: 1>} : vector<128x128xi32>
      %59 = vector.broadcast %44 : i32 to vector<128x128xi32>
      %60 = arith.addi %59, %58 : vector<128x128xi32>
      %61 = arith.cmpi eq, %57, %60 : vector<128x128xi32>
      %cst_33 = arith.constant 0.000000e+00 : f32
      %62 = vector.broadcast %cst_33 : f32 to vector<128x128xf32>
      %63 = arith.select %61, %22, %62 : vector<128x128xi1>, vector<128x128xf32>
      %cst_34 = arith.constant dense<0.000000e+00> : vector<128xf32>
      %64 = vector.multi_reduction <add>, %63, %cst_34 [1] : vector<128x128xf32> to vector<128xf32>
      %65 = arith.andi %61, %34 : vector<128x128xi1>
      %cst_35 = arith.constant 0.000000e+00 : f32
      %66 = vector.broadcast %cst_35 : f32 to vector<128x128xf32>
      %67 = arith.select %65, %12, %66 : vector<128x128xi1>, vector<128x128xf32>
      %cst_36 = arith.constant dense<0.000000e+00> : vector<128xf32>
      %68 = vector.multi_reduction <add>, %67, %cst_36 [1] : vector<128x128xf32> to vector<128xf32>
      %c0_37 = arith.constant 0 : index
      %c0_38 = arith.constant 0 : index
      %69 = vector.load %arg10[%c0_37, %c0_38] : memref<128x128xf32, #tpu.memory_space<vmem>>, vector<128x128xf32>
      %70 = vector.shape_cast %64 : vector<128xf32> to vector<128x1xf32>
      %71 = vector.broadcast %70 : vector<128x1xf32> to vector<128x128xf32>
      %72 = arith.subf %69, %71 : vector<128x128xf32>
      %c0_39 = arith.constant 0 : index
      %c0_40 = arith.constant 0 : index
      %73 = vector.load %arg10[%c0_39, %c0_40] : memref<128x128xf32, #tpu.memory_space<vmem>>, vector<128x128xf32>
      tpu.vector_store %arg10[%c0_39, %c0_40], %72 {strides = array<i32>} : memref<128x128xf32, #tpu.memory_space<vmem>>, vector<128x128xf32>,
      %c0_41 = arith.constant 0 : index
      %c0_42 = arith.constant 0 : index
      %74 = vector.load %arg11[%c0_41, %c0_42] : memref<128x128xf32, #tpu.memory_space<vmem>>, vector<128x128xf32>
      %75 = vector.shape_cast %68 : vector<128xf32> to vector<128x1xf32>
      %76 = vector.broadcast %75 : vector<128x1xf32> to vector<128x128xf32>
      %77 = arith.subf %74, %76 : vector<128x128xf32>
      %c0_43 = arith.constant 0 : index
      %c0_44 = arith.constant 0 : index
      %78 = vector.load %arg11[%c0_43, %c0_44] : memref<128x128xf32, #tpu.memory_space<vmem>>, vector<128x128xf32>
      tpu.vector_store %arg11[%c0_43, %c0_44], %77 {strides = array<i32>} : memref<128x128xf32, #tpu.memory_space<vmem>>, vector<128x128xf32>,
    } else {
    }
    %c0_i32_31 = arith.constant 0 : i32
    %52 = arith.cmpi eq, %arg1, %c0_i32_31 : i32
    %53 = arith.extui %52 : i1 to i32
    %c0_i32_32 = arith.constant 0 : i32
    %54 = arith.cmpi ne, %53, %c0_i32_32 : i32
    scf.if %54 {
      %c0_33 = arith.constant 0 : index
      %c0_34 = arith.constant 0 : index
      %55 = vector.load %arg7[%c0_33, %c0_34] : memref<128x1xf32, #tpu.memory_space<vmem>>, vector<128x1xf32>
      %c0_35 = arith.constant 0 : index
      %c0_36 = arith.constant 0 : index
      %56 = vector.load %arg9[%c0_35, %c0_36] : memref<128x128xf32, #tpu.memory_space<vmem>>, vector<128x128xf32>
      %57 = vector.extract_strided_slice %56 {offsets = [0, 0], sizes = [128, 1], strides = [1, 1]} : vector<128x128xf32> to vector<128x1xf32>
      %c0_37 = arith.constant 0 : index
      %c0_38 = arith.constant 0 : index
      %58 = vector.load %arg10[%c0_37, %c0_38] : memref<128x128xf32, #tpu.memory_space<vmem>>, vector<128x128xf32>
      %59 = vector.extract_strided_slice %58 {offsets = [0, 0], sizes = [128, 1], strides = [1, 1]} : vector<128x128xf32> to vector<128x1xf32>
      %c0_39 = arith.constant 0 : index
      %c0_40 = arith.constant 0 : index
      %60 = vector.load %arg11[%c0_39, %c0_40] : memref<128x128xf32, #tpu.memory_space<vmem>>, vector<128x128xf32>
      %61 = vector.extract_strided_slice %60 {offsets = [0, 0], sizes = [128, 1], strides = [1, 1]} : vector<128x128xf32> to vector<128x1xf32>
      %cst_41 = arith.constant 9.99999996E-13 : f32
      %62 = vector.broadcast %cst_41 : f32 to vector<128x1xf32>
      %63 = arith.addf %59, %62 : vector<128x1xf32>
      %64 = math.log %63 : vector<128x1xf32>
      %65 = arith.addf %57, %64 : vector<128x1xf32>
      %66 = arith.mulf %55, %65 : vector<128x1xf32>
      %67 = arith.subf %61, %66 : vector<128x1xf32>
      %cst_42 = arith.constant 9.99999996E-13 : f32
      %68 = vector.broadcast %cst_42 : f32 to vector<128x1xf32>
      %69 = arith.addf %55, %68 : vector<128x1xf32>
      %70 = arith.divf %67, %69 : vector<128x1xf32>
      %71 = tpu.iota {dimensions = array<i32: 0>} : vector<128x1xi32>
      %72 = vector.broadcast %43 : i32 to vector<128x1xi32>
      %73 = arith.addi %72, %71 : vector<128x1xi32>
      %c8_i32 = arith.constant 8 : i32
      %74 = vector.broadcast %c8_i32 : i32 to vector<128x1xi32>
      %75 = arith.cmpi slt, %73, %74 : vector<128x1xi32>
      %cst_43 = arith.constant -1.000000e+00 : f32
      %76 = vector.broadcast %cst_43 : f32 to vector<128x1xf32>
      %77 = arith.mulf %76, %70 : vector<128x1xf32>
      %cst_44 = arith.constant 0.000000e+00 : f32
      %78 = vector.broadcast %cst_44 : f32 to vector<128x1xf32>
      %79 = arith.select %75, %77, %78 : vector<128x1xi1>, vector<128x1xf32>
      %c0_45 = arith.constant 0 : index
      %c0_46 = arith.constant 0 : index
      %80 = vector.load %arg8[%c0_45, %c0_46] : memref<128x1xf32, #tpu.memory_space<vmem>>, vector<128x1xf32>
      tpu.vector_store %arg8[%c0_45, %c0_46], %79 {strides = array<i32>} : memref<128x1xf32, #tpu.memory_space<vmem>>, vector<128x1xf32>,
    } else {
    }
    return
  }
  func.func @transform_0(%arg0: i32, %arg1: i32) -> (i32, i32) {
    %c0_i32 = arith.constant 0 : i32
    %c0_i32_0 = arith.constant 0 : i32
    return %arg0, %c0_i32 : i32, i32
  }
  func.func @transform_1(%arg0: i32, %arg1: i32) -> (i32, i32, i32) {
    %c0_i32 = arith.constant 0 : i32
    %c0_i32_0 = arith.constant 0 : i32
    %c0_i32_1 = arith.constant 0 : i32
    %c0_i32_2 = arith.constant 0 : i32
    return %c0_i32, %c0_i32_0, %c0_i32_1 : i32, i32, i32
  }
  func.func @transform_2(%arg0: i32, %arg1: i32) -> (i32, i32) {
    %c0_i32 = arith.constant 0 : i32
    %c0_i32_0 = arith.constant 0 : i32
    return %arg0, %c0_i32 : i32, i32
  }
  func.func @transform_3(%arg0: i32, %arg1: i32) -> (i32, i32) {
    %c0_i32 = arith.constant 0 : i32
    %c0_i32_0 = arith.constant 0 : i32
    return %c0_i32, %arg1 : i32, i32
  }
  func.func @transform_4(%arg0: i32, %arg1: i32) -> (i32, i32) {
    %c0_i32 = arith.constant 0 : i32
    %c0_i32_0 = arith.constant 0 : i32
    return %c0_i32, %arg1 : i32, i32
  }
  func.func @transform_5(%arg0: i32, %arg1: i32) -> (i32, i32) {
    %c0_i32 = arith.constant 0 : i32
    %c0_i32_0 = arith.constant 0 : i32
    return %arg0, %c0_i32 : i32, i32
  }
  func.func @transform_6(%arg0: i32, %arg1: i32) -> (i32, i32) {
    %c0_i32 = arith.constant 0 : i32
    %c0_i32_0 = arith.constant 0 : i32
    return %arg0, %c0_i32 : i32, i32
  }
}

</mosaic_0001>

<llo_original>
// kernel: tpu_custom_call.1
$region0: #{tpu_custom_call.1}
  #allocation0 [shape = 'u32[]', space=smem, size = 0x4, offset = 0x4, fixed_abs, tag = 'smem constant byte address 0x4 - core index']
  #allocation1 [shape = 'u32[72,128]{1,0:T(1,128)}', space=vmem, size = 0x9000, scoped, tag = 'internal scratch']
  #allocation2 [shape = 'f32[128,128]{1,0:T(8,128)}', space=vmem, size = 0x10000, scoped, tag = 'scratch operand']
  #allocation3 [shape = 'f32[128,128]{1,0:T(8,128)}', space=vmem, size = 0x10000, scoped, tag = 'scratch operand']
  #allocation4 [shape = 'f32[128,128]{1,0:T(8,128)}', space=vmem, size = 0x10000, scoped, tag = 'scratch operand']
  %s0 = inlined_call_operand.vmem [shape: bf16[128,128], index: 0, kind: input, shape index: {}]
  %s1 = inlined_call_operand.vmem [shape: bf16[1,128,128], index: 1, kind: input, shape index: {}]
  %s2 = inlined_call_operand.vmem [shape: s32[128,1], index: 2, kind: input, shape index: {}]
  %s3 = inlined_call_operand.vmem [shape: s32[1,128], index: 3, kind: input, shape index: {}]
  %s4 = inlined_call_operand.vmem [shape: f32[1,128], index: 4, kind: input, shape index: {}]
  %s5 = inlined_call_operand.vmem [shape: f32[128,1], index: 5, kind: input, shape index: {}]
  %s6 = inlined_call_operand.vmem [shape: f32[128,1], index: 6, kind: output, shape index: {}]
  %s7 = sld [smem:[#allocation0]]
  $region46: #{tpu_custom_call.1} parent=0
    _
  %s9 = ssub.s32 1, %s7
  %s10 = scalar_select 0, %s9, %s7
  // Predicated region
  $region2: #{tpu_custom_call.1} parent=0 // pred_check
    _
  $region3: #{tpu_custom_call.1} parent=0 // pred_check_branch
    %12 = sbr.rel (0) target = $region5
  $region4: #{tpu_custom_call.1} parent=0 // pred_region
    _
  $region5: #{tpu_custom_call.1} parent=0 // pred_fallthru
    _
  // Predicated region
  $region6: #{tpu_custom_call.1} parent=0 // pred_check
    _
  $region7: #{tpu_custom_call.1} parent=0 // pred_check_branch
    %14 = sbr.rel (0) target = $region9
  $region8: #{tpu_custom_call.1} parent=0 // pred_region
    _
  $region9: #{tpu_custom_call.1} parent=0 // pred_fallthru
    _
  // Predicated region
  $region10: #{tpu_custom_call.1} parent=0 // pred_check
    _
  $region11: #{tpu_custom_call.1} parent=0 // pred_check_branch
    %16 = sbr.rel (0) target = $region13
  $region12: #{tpu_custom_call.1} parent=0 // pred_region
    _
  $region13: #{tpu_custom_call.1} parent=0 // pred_fallthru
    _
  // Predicated region
  $region14: #{tpu_custom_call.1} parent=0 // pred_check
    _
  $region15: #{tpu_custom_call.1} parent=0 // pred_check_branch
    %18 = sbr.rel (0) target = $region17
  $region16: #{tpu_custom_call.1} parent=0 // pred_region
    _
  $region17: #{tpu_custom_call.1} parent=0 // pred_fallthru
    _
  // Predicated region
  $region18: #{tpu_custom_call.1} parent=0 // pred_check
    _
  $region19: #{tpu_custom_call.1} parent=0 // pred_check_branch
    %20 = sbr.rel (0) target = $region21
  $region20: #{tpu_custom_call.1} parent=0 // pred_region
    _
  $region21: #{tpu_custom_call.1} parent=0 // pred_fallthru
    _
  // Predicated region
  $region22: #{tpu_custom_call.1} parent=0 // pred_check
    _
  $region23: #{tpu_custom_call.1} parent=0 // pred_check_branch
    %22 = sbr.rel (0) target = $region25
  $region24: #{tpu_custom_call.1} parent=0 // pred_region
    _
  $region25: #{tpu_custom_call.1} parent=0 // pred_fallthru
    _
  %p23 = scmp.eq.s32.totalorder 0, 0
  // Predicated region
  $region26: #{tpu_custom_call.1} parent=0 // pred_check
    %p24 = pneg %p23
  $region27: #{tpu_custom_call.1} parent=0 // pred_check_branch
    %26 = sbr.rel (%p24) target = $region29
  $region28: #{tpu_custom_call.1} parent=0 // pred_region
    %27 = vst [vmem:[#allocation2] sm:$0xff] -1e+30
    %28 = vst [vmem:[#allocation2 + $0x8] sm:$0xff] -1e+30
    %29 = vst [vmem:[#allocation2 + $0x10] sm:$0xff] -1e+30
    %30 = vst [vmem:[#allocation2 + $0x18] sm:$0xff] -1e+30
    %31 = vst [vmem:[#allocation2 + $0x20] sm:$0xff] -1e+30
    %32 = vst [vmem:[#allocation2 + $0x28] sm:$0xff] -1e+30
    %33 = vst [vmem:[#allocation2 + $0x30] sm:$0xff] -1e+30
    %34 = vst [vmem:[#allocation2 + $0x38] sm:$0xff] -1e+30
    %35 = vst [vmem:[#allocation2 + $0x40] sm:$0xff] -1e+30
    %36 = vst [vmem:[#allocation2 + $0x48] sm:$0xff] -1e+30
    %37 = vst [vmem:[#allocation2 + $0x50] sm:$0xff] -1e+30
    %38 = vst [vmem:[#allocation2 + $0x58] sm:$0xff] -1e+30
    %39 = vst [vmem:[#allocation2 + $0x60] sm:$0xff] -1e+30
    %40 = vst [vmem:[#allocation2 + $0x68] sm:$0xff] -1e+30
    %41 = vst [vmem:[#allocation2 + $0x70] sm:$0xff] -1e+30
    %42 = vst [vmem:[#allocation2 + $0x78] sm:$0xff] -1e+30
    %43 = vst [vmem:[#allocation3] sm:$0xff] 0.0
    %44 = vst [vmem:[#allocation3 + $0x8] sm:$0xff] 0.0
    %45 = vst [vmem:[#allocation3 + $0x10] sm:$0xff] 0.0
    %46 = vst [vmem:[#allocation3 + $0x18] sm:$0xff] 0.0
    %47 = vst [vmem:[#allocation3 + $0x20] sm:$0xff] 0.0
    %48 = vst [vmem:[#allocation3 + $0x28] sm:$0xff] 0.0
    %49 = vst [vmem:[#allocation3 + $0x30] sm:$0xff] 0.0
    %50 = vst [vmem:[#allocation3 + $0x38] sm:$0xff] 0.0
    %51 = vst [vmem:[#allocation3 + $0x40] sm:$0xff] 0.0
    %52 = vst [vmem:[#allocation3 + $0x48] sm:$0xff] 0.0
    %53 = vst [vmem:[#allocation3 + $0x50] sm:$0xff] 0.0
    %54 = vst [vmem:[#allocation3 + $0x58] sm:$0xff] 0.0
    %55 = vst [vmem:[#allocation3 + $0x60] sm:$0xff] 0.0
    %56 = vst [vmem:[#allocation3 + $0x68] sm:$0xff] 0.0
    %57 = vst [vmem:[#allocation3 + $0x70] sm:$0xff] 0.0
    %58 = vst [vmem:[#allocation3 + $0x78] sm:$0xff] 0.0
    %59 = vst [vmem:[#allocation4] sm:$0xff] 0.0
    %60 = vst [vmem:[#allocation4 + $0x8] sm:$0xff] 0.0
    %61 = vst [vmem:[#allocation4 + $0x10] sm:$0xff] 0.0
    %62 = vst [vmem:[#allocation4 + $0x18] sm:$0xff] 0.0
    %63 = vst [vmem:[#allocation4 + $0x20] sm:$0xff] 0.0
    %64 = vst [vmem:[#allocation4 + $0x28] sm:$0xff] 0.0
    %65 = vst [vmem:[#allocation4 + $0x30] sm:$0xff] 0.0
    %66 = vst [vmem:[#allocation4 + $0x38] sm:$0xff] 0.0
    %67 = vst [vmem:[#allocation4 + $0x40] sm:$0xff] 0.0
    %68 = vst [vmem:[#allocation4 + $0x48] sm:$0xff] 0.0
    %69 = vst [vmem:[#allocation4 + $0x50] sm:$0xff] 0.0
    %70 = vst [vmem:[#allocation4 + $0x58] sm:$0xff] 0.0
    %71 = vst [vmem:[#allocation4 + $0x60] sm:$0xff] 0.0
    %72 = vst [vmem:[#allocation4 + $0x68] sm:$0xff] 0.0
    %73 = vst [vmem:[#allocation4 + $0x70] sm:$0xff] 0.0
    %74 = vst [vmem:[#allocation4 + $0x78] sm:$0xff] 0.0
  $region29: #{tpu_custom_call.1} parent=0 // pred_fallthru
    _
  %s75 = smul.u32 0, 16
  %s76 = smul.addr %s75, 4
  %s77 = scalar_lea.vmem %s1, %s76
  %v78 = vld [vmem:[%s77] sm:$0xf]
  %v79 = vld [vmem:[%s77 + $0x4] sm:$0xf]
  %v80 = vld [vmem:[%s77 + $0x8] sm:$0xf]
  %v81 = vld [vmem:[%s77 + $0xc] sm:$0xf]
  %v82 = vld [vmem:[%s77 + $0x10] sm:$0xf]
  %v83 = vld [vmem:[%s77 + $0x14] sm:$0xf]
  %v84 = vld [vmem:[%s77 + $0x18] sm:$0xf]
  %v85 = vld [vmem:[%s77 + $0x1c] sm:$0xf]
  %v86 = vld [vmem:[%s77 + $0x20] sm:$0xf]
  %v87 = vld [vmem:[%s77 + $0x24] sm:$0xf]
  %v88 = vld [vmem:[%s77 + $0x28] sm:$0xf]
  %v89 = vld [vmem:[%s77 + $0x2c] sm:$0xf]
  %v90 = vld [vmem:[%s77 + $0x30] sm:$0xf]
  %v91 = vld [vmem:[%s77 + $0x34] sm:$0xf]
  %v92 = vld [vmem:[%s77 + $0x38] sm:$0xf]
  %v93 = vld [vmem:[%s77 + $0x3c] sm:$0xf]
  %v94 = vld [vmem:[%s0] sm:$0xf]
  %v95 = vld [vmem:[%s0 + $0x4] sm:$0xf]
  %v96 = vld [vmem:[%s0 + $0x8] sm:$0xf]
  %v97 = vld [vmem:[%s0 + $0xc] sm:$0xf]
  %v98 = vld [vmem:[%s0 + $0x10] sm:$0xf]
  %v99 = vld [vmem:[%s0 + $0x14] sm:$0xf]
  %v100 = vld [vmem:[%s0 + $0x18] sm:$0xf]
  %v101 = vld [vmem:[%s0 + $0x1c] sm:$0xf]
  %v102 = vld [vmem:[%s0 + $0x20] sm:$0xf]
  %v103 = vld [vmem:[%s0 + $0x24] sm:$0xf]
  %v104 = vld [vmem:[%s0 + $0x28] sm:$0xf]
  %v105 = vld [vmem:[%s0 + $0x2c] sm:$0xf]
  %v106 = vld [vmem:[%s0 + $0x30] sm:$0xf]
  %v107 = vld [vmem:[%s0 + $0x34] sm:$0xf]
  %v108 = vld [vmem:[%s0 + $0x38] sm:$0xf]
  %v109 = vld [vmem:[%s0 + $0x3c] sm:$0xf]
  %v126 = vunpack.c.l.b16 %v94
  %v127 = vunpack.c.l.b16 %v95
  %v128 = vunpack.c.l.b16 %v96
  %v129 = vunpack.c.l.b16 %v97
  %v130 = vunpack.c.l.b16 %v98
  %v131 = vunpack.c.l.b16 %v99
  %v132 = vunpack.c.l.b16 %v100
  %v133 = vunpack.c.l.b16 %v101
  %v134 = vunpack.c.l.b16 %v102
  %v135 = vunpack.c.l.b16 %v103
  %v136 = vunpack.c.l.b16 %v104
  %v137 = vunpack.c.l.b16 %v105
  %v138 = vunpack.c.l.b16 %v106
  %v139 = vunpack.c.l.b16 %v107
  %v140 = vunpack.c.l.b16 %v108
  %v141 = vunpack.c.l.b16 %v109
  %v142 = vpack.c.b16 %v127, %v126
  %v143 = vpack.c.b16 %v129, %v128
  %v144 = vpack.c.b16 %v131, %v130
  %v145 = vpack.c.b16 %v133, %v132
  %v146 = vpack.c.b16 %v135, %v134
  %v147 = vpack.c.b16 %v137, %v136
  %v148 = vpack.c.b16 %v139, %v138
  %v149 = vpack.c.b16 %v141, %v140
  %v174 = vunpack.c.l.b16 %v78
  %v175 = vunpack.c.l.b16 %v79
  %v176 = vunpack.c.l.b16 %v80
  %v177 = vunpack.c.l.b16 %v81
  %v178 = vunpack.c.l.b16 %v82
  %v179 = vunpack.c.l.b16 %v83
  %v180 = vunpack.c.l.b16 %v84
  %v181 = vunpack.c.l.b16 %v85
  %v182 = vunpack.c.l.b16 %v86
  %v183 = vunpack.c.l.b16 %v87
  %v184 = vunpack.c.l.b16 %v88
  %v185 = vunpack.c.l.b16 %v89
  %v186 = vunpack.c.l.b16 %v90
  %v187 = vunpack.c.l.b16 %v91
  %v188 = vunpack.c.l.b16 %v92
  %v189 = vunpack.c.l.b16 %v93
  %v190 = vpack.c.b16 %v175, %v174
  %v191 = vpack.c.b16 %v177, %v176
  %v192 = vpack.c.b16 %v179, %v178
  %v193 = vpack.c.b16 %v181, %v180
  %v194 = vpack.c.b16 %v183, %v182
  %v195 = vpack.c.b16 %v185, %v184
  %v196 = vpack.c.b16 %v187, %v186
  %v197 = vpack.c.b16 %v189, %v188
  %206 = vmatpush.bf16.msra.mxu0 %v197
  %207 = vmatpush.bf16.msra.mxu0 %v196
  %208 = vmatpush.bf16.msra.mxu0 %v195
  %209 = vmatpush.bf16.msra.mxu0 %v194
  %210 = vmatpush.bf16.msra.mxu0 %v193
  %211 = vmatpush.bf16.msra.mxu0 %v192
  %212 = vmatpush.bf16.msra.mxu0 %v191
  %213 = vmatpush.bf16.msra.mxu0 %v190
  %214 = vmatmul.bf16.gmra.mxu0 %v142
  %v215 = vpop.f32.mrf.mxu0
  %v216 = vadd.f32 0.0, %v215
  %v217 = vpop.f32.mrf.mxu0
  %v218 = vadd.f32 0.0, %v217
  %219 = vmatmul.bf16.gmra.mxu0 %v143
  %v220 = vpop.f32.mrf.mxu0
  %v221 = vadd.f32 0.0, %v220
  %v222 = vpop.f32.mrf.mxu0
  %v223 = vadd.f32 0.0, %v222
  %224 = vmatmul.bf16.gmra.mxu0 %v144
  %v225 = vpop.f32.mrf.mxu0
  %v226 = vadd.f32 0.0, %v225
  %v227 = vpop.f32.mrf.mxu0
  %v228 = vadd.f32 0.0, %v227
  %229 = vmatmul.bf16.gmra.mxu0 %v145
  %v230 = vpop.f32.mrf.mxu0
  %v231 = vadd.f32 0.0, %v230
  %v232 = vpop.f32.mrf.mxu0
  %v233 = vadd.f32 0.0, %v232
  %234 = vmatmul.bf16.gmra.mxu0 %v146
  %v235 = vpop.f32.mrf.mxu0
  %v236 = vadd.f32 0.0, %v235
  %v237 = vpop.f32.mrf.mxu0
  %v238 = vadd.f32 0.0, %v237
  %239 = vmatmul.bf16.gmra.mxu0 %v147
  %v240 = vpop.f32.mrf.mxu0
  %v241 = vadd.f32 0.0, %v240
  %v242 = vpop.f32.mrf.mxu0
  %v243 = vadd.f32 0.0, %v242
  %244 = vmatmul.bf16.gmra.mxu0 %v148
  %v245 = vpop.f32.mrf.mxu0
  %v246 = vadd.f32 0.0, %v245
  %v247 = vpop.f32.mrf.mxu0
  %v248 = vadd.f32 0.0, %v247
  %249 = vmatmul.bf16.gmra.mxu0 %v149
  %v250 = vpop.f32.mrf.mxu0
  %v251 = vadd.f32 0.0, %v250
  %v252 = vpop.f32.mrf.mxu0
  %v253 = vadd.f32 0.0, %v252
  %254 = vdwg.mxu0
  %v255 = vmul.f32 %v216, 10.0
  %v256 = vmul.f32 %v218, 10.0
  %v257 = vmul.f32 %v221, 10.0
  %v258 = vmul.f32 %v223, 10.0
  %v259 = vmul.f32 %v226, 10.0
  %v260 = vmul.f32 %v228, 10.0
  %v261 = vmul.f32 %v231, 10.0
  %v262 = vmul.f32 %v233, 10.0
  %v263 = vmul.f32 %v236, 10.0
  %v264 = vmul.f32 %v238, 10.0
  %v265 = vmul.f32 %v241, 10.0
  %v266 = vmul.f32 %v243, 10.0
  %v267 = vmul.f32 %v246, 10.0
  %v268 = vmul.f32 %v248, 10.0
  %v269 = vmul.f32 %v251, 10.0
  %v270 = vmul.f32 %v253, 10.0
  %v271 = vld [vmem:[%s4] sm:$0x1]
  %v273 = vperm.slane %v271, 0
  %v275 = vadd.f32 %v255, %v273
  %v276 = vadd.f32 %v256, %v273
  %v277 = vadd.f32 %v257, %v273
  %v278 = vadd.f32 %v258, %v273
  %v279 = vadd.f32 %v259, %v273
  %v280 = vadd.f32 %v260, %v273
  %v281 = vadd.f32 %v261, %v273
  %v282 = vadd.f32 %v262, %v273
  %v283 = vadd.f32 %v263, %v273
  %v284 = vadd.f32 %v264, %v273
  %v285 = vadd.f32 %v265, %v273
  %v286 = vadd.f32 %v266, %v273
  %v287 = vadd.f32 %v267, %v273
  %v288 = vadd.f32 %v268, %v273
  %v289 = vadd.f32 %v269, %v273
  %v290 = vadd.f32 %v270, %v273
  %v291 = vld [vmem:[#allocation2] sm:$0xff]
  %v292 = vld [vmem:[#allocation2 + $0x8] sm:$0xff]
  %v293 = vld [vmem:[#allocation2 + $0x10] sm:$0xff]
  %v294 = vld [vmem:[#allocation2 + $0x18] sm:$0xff]
  %v295 = vld [vmem:[#allocation2 + $0x20] sm:$0xff]
  %v296 = vld [vmem:[#allocation2 + $0x28] sm:$0xff]
  %v297 = vld [vmem:[#allocation2 + $0x30] sm:$0xff]
  %v298 = vld [vmem:[#allocation2 + $0x38] sm:$0xff]
  %v299 = vld [vmem:[#allocation2 + $0x40] sm:$0xff]
  %v300 = vld [vmem:[#allocation2 + $0x48] sm:$0xff]
  %v301 = vld [vmem:[#allocation2 + $0x50] sm:$0xff]
  %v302 = vld [vmem:[#allocation2 + $0x58] sm:$0xff]
  %v303 = vld [vmem:[#allocation2 + $0x60] sm:$0xff]
  %v304 = vld [vmem:[#allocation2 + $0x68] sm:$0xff]
  %v305 = vld [vmem:[#allocation2 + $0x70] sm:$0xff]
  %v306 = vld [vmem:[#allocation2 + $0x78] sm:$0xff]
  %v307 = vld [vmem:[#allocation3] sm:$0xff]
  %v308 = vld [vmem:[#allocation3 + $0x8] sm:$0xff]
  %v309 = vld [vmem:[#allocation3 + $0x10] sm:$0xff]
  %v310 = vld [vmem:[#allocation3 + $0x18] sm:$0xff]
  %v311 = vld [vmem:[#allocation3 + $0x20] sm:$0xff]
  %v312 = vld [vmem:[#allocation3 + $0x28] sm:$0xff]
  %v313 = vld [vmem:[#allocation3 + $0x30] sm:$0xff]
  %v314 = vld [vmem:[#allocation3 + $0x38] sm:$0xff]
  %v315 = vld [vmem:[#allocation3 + $0x40] sm:$0xff]
  %v316 = vld [vmem:[#allocation3 + $0x48] sm:$0xff]
  %v317 = vld [vmem:[#allocation3 + $0x50] sm:$0xff]
  %v318 = vld [vmem:[#allocation3 + $0x58] sm:$0xff]
  %v319 = vld [vmem:[#allocation3 + $0x60] sm:$0xff]
  %v320 = vld [vmem:[#allocation3 + $0x68] sm:$0xff]
  %v321 = vld [vmem:[#allocation3 + $0x70] sm:$0xff]
  %v322 = vld [vmem:[#allocation3 + $0x78] sm:$0xff]
  %323 = vmax.xlane.f32.xlu0 %v275
  %v324 = vpop.xlane.xlu0 %323
  %325 = vmax.xlane.f32.xlu0 %v276
  %v326 = vpop.xlane.xlu0 %325
  %327 = vmax.xlane.f32.xlu0 %v277
  %v328 = vpop.xlane.xlu0 %327
  %329 = vmax.xlane.f32.xlu0 %v278
  %v330 = vpop.xlane.xlu0 %329
  %331 = vmax.xlane.f32.xlu0 %v279
  %v332 = vpop.xlane.xlu0 %331
  %333 = vmax.xlane.f32.xlu0 %v280
  %v334 = vpop.xlane.xlu0 %333
  %335 = vmax.xlane.f32.xlu0 %v281
  %v336 = vpop.xlane.xlu0 %335
  %337 = vmax.xlane.f32.xlu0 %v282
  %v338 = vpop.xlane.xlu0 %337
  %339 = vmax.xlane.f32.xlu0 %v283
  %v340 = vpop.xlane.xlu0 %339
  %341 = vmax.xlane.f32.xlu0 %v284
  %v342 = vpop.xlane.xlu0 %341
  %343 = vmax.xlane.f32.xlu0 %v285
  %v344 = vpop.xlane.xlu0 %343
  %345 = vmax.xlane.f32.xlu0 %v286
  %v346 = vpop.xlane.xlu0 %345
  %347 = vmax.xlane.f32.xlu0 %v287
  %v348 = vpop.xlane.xlu0 %347
  %349 = vmax.xlane.f32.xlu0 %v288
  %v350 = vpop.xlane.xlu0 %349
  %351 = vmax.xlane.f32.xlu0 %v289
  %v352 = vpop.xlane.xlu0 %351
  %353 = vmax.xlane.f32.xlu0 %v290
  %v354 = vpop.xlane.xlu0 %353
  %v355 = vmax.f32 %v291, %v324
  %v356 = vmax.f32 %v292, %v326
  %v357 = vmax.f32 %v293, %v328
  %v358 = vmax.f32 %v294, %v330
  %v359 = vmax.f32 %v295, %v332
  %v360 = vmax.f32 %v296, %v334
  %v361 = vmax.f32 %v297, %v336
  %v362 = vmax.f32 %v298, %v338
  %v363 = vmax.f32 %v299, %v340
  %v364 = vmax.f32 %v300, %v342
  %v365 = vmax.f32 %v301, %v344
  %v366 = vmax.f32 %v302, %v346
  %v367 = vmax.f32 %v303, %v348
  %v368 = vmax.f32 %v304, %v350
  %v369 = vmax.f32 %v305, %v352
  %v370 = vmax.f32 %v306, %v354
  %v371 = vsub.f32 %v291, %v355
  %v372 = vsub.f32 %v292, %v356
  %v373 = vsub.f32 %v293, %v357
  %v374 = vsub.f32 %v294, %v358
  %v375 = vsub.f32 %v295, %v359
  %v376 = vsub.f32 %v296, %v360
  %v377 = vsub.f32 %v297, %v361
  %v378 = vsub.f32 %v298, %v362
  %v379 = vsub.f32 %v299, %v363
  %v380 = vsub.f32 %v300, %v364
  %v381 = vsub.f32 %v301, %v365
  %v382 = vsub.f32 %v302, %v366
  %v383 = vsub.f32 %v303, %v367
  %v384 = vsub.f32 %v304, %v368
  %v385 = vsub.f32 %v305, %v369
  %v386 = vsub.f32 %v306, %v370
  %v387 = vmul.f32 %v371, 1.442695
  %v388 = vpow.pop %v387
  %v389 = vmul.f32 %v372, 1.442695
  %v390 = vpow.pop %v389
  %v391 = vmul.f32 %v373, 1.442695
  %v392 = vpow.pop %v391
  %v393 = vmul.f32 %v374, 1.442695
  %v394 = vpow.pop %v393
  %v395 = vmul.f32 %v375, 1.442695
  %v396 = vpow.pop %v395
  %v397 = vmul.f32 %v376, 1.442695
  %v398 = vpow.pop %v397
  %v399 = vmul.f32 %v377, 1.442695
  %v400 = vpow.pop %v399
  %v401 = vmul.f32 %v378, 1.442695
  %v402 = vpow.pop %v401
  %v403 = vmul.f32 %v379, 1.442695
  %v404 = vpow.pop %v403
  %v405 = vmul.f32 %v380, 1.442695
  %v406 = vpow.pop %v405
  %v407 = vmul.f32 %v381, 1.442695
  %v408 = vpow.pop %v407
  %v409 = vmul.f32 %v382, 1.442695
  %v410 = vpow.pop %v409
  %v411 = vmul.f32 %v383, 1.442695
  %v412 = vpow.pop %v411
  %v413 = vmul.f32 %v384, 1.442695
  %v414 = vpow.pop %v413
  %v415 = vmul.f32 %v385, 1.442695
  %v416 = vpow.pop %v415
  %v417 = vmul.f32 %v386, 1.442695
  %v418 = vpow.pop %v417
  %v419 = vsub.f32 %v275, %v355
  %v420 = vsub.f32 %v276, %v356
  %v421 = vsub.f32 %v277, %v357
  %v422 = vsub.f32 %v278, %v358
  %v423 = vsub.f32 %v279, %v359
  %v424 = vsub.f32 %v280, %v360
  %v425 = vsub.f32 %v281, %v361
  %v426 = vsub.f32 %v282, %v362
  %v427 = vsub.f32 %v283, %v363
  %v428 = vsub.f32 %v284, %v364
  %v429 = vsub.f32 %v285, %v365
  %v430 = vsub.f32 %v286, %v366
  %v431 = vsub.f32 %v287, %v367
  %v432 = vsub.f32 %v288, %v368
  %v433 = vsub.f32 %v289, %v369
  %v434 = vsub.f32 %v290, %v370
  %v435 = vmul.f32 %v419, 1.442695
  %v436 = vpow.pop %v435
  %v437 = vmul.f32 %v420, 1.442695
  %v438 = vpow.pop %v437
  %v439 = vmul.f32 %v421, 1.442695
  %v440 = vpow.pop %v439
  %v441 = vmul.f32 %v422, 1.442695
  %v442 = vpow.pop %v441
  %v443 = vmul.f32 %v423, 1.442695
  %v444 = vpow.pop %v443
  %v445 = vmul.f32 %v424, 1.442695
  %v446 = vpow.pop %v445
  %v447 = vmul.f32 %v425, 1.442695
  %v448 = vpow.pop %v447
  %v449 = vmul.f32 %v426, 1.442695
  %v450 = vpow.pop %v449
  %v451 = vmul.f32 %v427, 1.442695
  %v452 = vpow.pop %v451
  %v453 = vmul.f32 %v428, 1.442695
  %v454 = vpow.pop %v453
  %v455 = vmul.f32 %v429, 1.442695
  %v456 = vpow.pop %v455
  %v457 = vmul.f32 %v430, 1.442695
  %v458 = vpow.pop %v457
  %v459 = vmul.f32 %v431, 1.442695
  %v460 = vpow.pop %v459
  %v461 = vmul.f32 %v432, 1.442695
  %v462 = vpow.pop %v461
  %v463 = vmul.f32 %v433, 1.442695
  %v464 = vpow.pop %v463
  %v465 = vmul.f32 %v434, 1.442695
  %v466 = vpow.pop %v465
  %467 = vadd.xlane.f32.xlu0 %v436
  %v468 = vpop.xlane.xlu0 %467
  %469 = vadd.xlane.f32.xlu0 %v438
  %v470 = vpop.xlane.xlu0 %469
  %471 = vadd.xlane.f32.xlu0 %v440
  %v472 = vpop.xlane.xlu0 %471
  %473 = vadd.xlane.f32.xlu0 %v442
  %v474 = vpop.xlane.xlu0 %473
  %475 = vadd.xlane.f32.xlu0 %v444
  %v476 = vpop.xlane.xlu0 %475
  %477 = vadd.xlane.f32.xlu0 %v446
  %v478 = vpop.xlane.xlu0 %477
  %479 = vadd.xlane.f32.xlu0 %v448
  %v480 = vpop.xlane.xlu0 %479
  %481 = vadd.xlane.f32.xlu0 %v450
  %v482 = vpop.xlane.xlu0 %481
  %483 = vadd.xlane.f32.xlu0 %v452
  %v484 = vpop.xlane.xlu0 %483
  %485 = vadd.xlane.f32.xlu0 %v454
  %v486 = vpop.xlane.xlu0 %485
  %487 = vadd.xlane.f32.xlu0 %v456
  %v488 = vpop.xlane.xlu0 %487
  %489 = vadd.xlane.f32.xlu0 %v458
  %v490 = vpop.xlane.xlu0 %489
  %491 = vadd.xlane.f32.xlu0 %v460
  %v492 = vpop.xlane.xlu0 %491
  %493 = vadd.xlane.f32.xlu0 %v462
  %v494 = vpop.xlane.xlu0 %493
  %495 = vadd.xlane.f32.xlu0 %v464
  %v496 = vpop.xlane.xlu0 %495
  %497 = vadd.xlane.f32.xlu0 %v466
  %v498 = vpop.xlane.xlu0 %497
  %v499 = vmul.f32 %v388, %v307
  %v500 = vmul.f32 %v390, %v308
  %v501 = vmul.f32 %v392, %v309
  %v502 = vmul.f32 %v394, %v310
  %v503 = vmul.f32 %v396, %v311
  %v504 = vmul.f32 %v398, %v312
  %v505 = vmul.f32 %v400, %v313
  %v506 = vmul.f32 %v402, %v314
  %v507 = vmul.f32 %v404, %v315
  %v508 = vmul.f32 %v406, %v316
  %v509 = vmul.f32 %v408, %v317
  %v510 = vmul.f32 %v410, %v318
  %v511 = vmul.f32 %v412, %v319
  %v512 = vmul.f32 %v414, %v320
  %v513 = vmul.f32 %v416, %v321
  %v514 = vmul.f32 %v418, %v322
  %v515 = vadd.f32 %v499, %v468
  %v516 = vadd.f32 %v500, %v470
  %v517 = vadd.f32 %v501, %v472
  %v518 = vadd.f32 %v502, %v474
  %v519 = vadd.f32 %v503, %v476
  %v520 = vadd.f32 %v504, %v478
  %v521 = vadd.f32 %v505, %v480
  %v522 = vadd.f32 %v506, %v482
  %v523 = vadd.f32 %v507, %v484
  %v524 = vadd.f32 %v508, %v486
  %v525 = vadd.f32 %v509, %v488
  %v526 = vadd.f32 %v510, %v490
  %v527 = vadd.f32 %v511, %v492
  %v528 = vadd.f32 %v512, %v494
  %v529 = vadd.f32 %v513, %v496
  %v530 = vadd.f32 %v514, %v498
  %531 = vst [vmem:[#allocation3] sm:$0xff] %v515
  %532 = vst [vmem:[#allocation3 + $0x8] sm:$0xff] %v516
  %533 = vst [vmem:[#allocation3 + $0x10] sm:$0xff] %v517
  %534 = vst [vmem:[#allocation3 + $0x18] sm:$0xff] %v518
  %535 = vst [vmem:[#allocation3 + $0x20] sm:$0xff] %v519
  %536 = vst [vmem:[#allocation3 + $0x28] sm:$0xff] %v520
  %537 = vst [vmem:[#allocation3 + $0x30] sm:$0xff] %v521
  %538 = vst [vmem:[#allocation3 + $0x38] sm:$0xff] %v522
  %539 = vst [vmem:[#allocation3 + $0x40] sm:$0xff] %v523
  %540 = vst [vmem:[#allocation3 + $0x48] sm:$0xff] %v524
  %541 = vst [vmem:[#allocation3 + $0x50] sm:$0xff] %v525
  %542 = vst [vmem:[#allocation3 + $0x58] sm:$0xff] %v526
  %543 = vst [vmem:[#allocation3 + $0x60] sm:$0xff] %v527
  %544 = vst [vmem:[#allocation3 + $0x68] sm:$0xff] %v528
  %545 = vst [vmem:[#allocation3 + $0x70] sm:$0xff] %v529
  %546 = vst [vmem:[#allocation3 + $0x78] sm:$0xff] %v530
  %547 = vst [vmem:[#allocation2] sm:$0xff] %v355
  %548 = vst [vmem:[#allocation2 + $0x8] sm:$0xff] %v356
  %549 = vst [vmem:[#allocation2 + $0x10] sm:$0xff] %v357
  %550 = vst [vmem:[#allocation2 + $0x18] sm:$0xff] %v358
  %551 = vst [vmem:[#allocation2 + $0x20] sm:$0xff] %v359
  %552 = vst [vmem:[#allocation2 + $0x28] sm:$0xff] %v360
  %553 = vst [vmem:[#allocation2 + $0x30] sm:$0xff] %v361
  %554 = vst [vmem:[#allocation2 + $0x38] sm:$0xff] %v362
  %555 = vst [vmem:[#allocation2 + $0x40] sm:$0xff] %v363
  %556 = vst [vmem:[#allocation2 + $0x48] sm:$0xff] %v364
  %557 = vst [vmem:[#allocation2 + $0x50] sm:$0xff] %v365
  %558 = vst [vmem:[#allocation2 + $0x58] sm:$0xff] %v366
  %559 = vst [vmem:[#allocation2 + $0x60] sm:$0xff] %v367
  %560 = vst [vmem:[#allocation2 + $0x68] sm:$0xff] %v368
  %561 = vst [vmem:[#allocation2 + $0x70] sm:$0xff] %v369
  %562 = vst [vmem:[#allocation2 + $0x78] sm:$0xff] %v370
  %v563 = vld [vmem:[%s2] sm:$0xff]
  %v564 = vld [vmem:[%s2 + $0x8] sm:$0xff]
  %v565 = vld [vmem:[%s2 + $0x10] sm:$0xff]
  %v566 = vld [vmem:[%s2 + $0x18] sm:$0xff]
  %v567 = vld [vmem:[%s2 + $0x20] sm:$0xff]
  %v568 = vld [vmem:[%s2 + $0x28] sm:$0xff]
  %v569 = vld [vmem:[%s2 + $0x30] sm:$0xff]
  %v570 = vld [vmem:[%s2 + $0x38] sm:$0xff]
  %v571 = vld [vmem:[%s2 + $0x40] sm:$0xff]
  %v572 = vld [vmem:[%s2 + $0x48] sm:$0xff]
  %v573 = vld [vmem:[%s2 + $0x50] sm:$0xff]
  %v574 = vld [vmem:[%s2 + $0x58] sm:$0xff]
  %v575 = vld [vmem:[%s2 + $0x60] sm:$0xff]
  %v576 = vld [vmem:[%s2 + $0x68] sm:$0xff]
  %v577 = vld [vmem:[%s2 + $0x70] sm:$0xff]
  %v578 = vld [vmem:[%s2 + $0x78] sm:$0xff]
  %v579 = vld [vmem:[%s3] sm:$0x1]
  %580 = vset.pattern.permute.xlu0 0
  %581 = vperm.xlu0 %580, %v563
  %v582 = vpop.permute.xlu0 %581
  %583 = vset.pattern.permute.xlu0 0
  %584 = vperm.xlu0 %583, %v564
  %v585 = vpop.permute.xlu0 %584
  %586 = vset.pattern.permute.xlu0 0
  %587 = vperm.xlu0 %586, %v565
  %v588 = vpop.permute.xlu0 %587
  %589 = vset.pattern.permute.xlu0 0
  %590 = vperm.xlu0 %589, %v566
  %v591 = vpop.permute.xlu0 %590
  %592 = vset.pattern.permute.xlu0 0
  %593 = vperm.xlu0 %592, %v567
  %v594 = vpop.permute.xlu0 %593
  %595 = vset.pattern.permute.xlu0 0
  %596 = vperm.xlu0 %595, %v568
  %v597 = vpop.permute.xlu0 %596
  %598 = vset.pattern.permute.xlu0 0
  %599 = vperm.xlu0 %598, %v569
  %v600 = vpop.permute.xlu0 %599
  %601 = vset.pattern.permute.xlu0 0
  %602 = vperm.xlu0 %601, %v570
  %v603 = vpop.permute.xlu0 %602
  %604 = vset.pattern.permute.xlu0 0
  %605 = vperm.xlu0 %604, %v571
  %v606 = vpop.permute.xlu0 %605
  %607 = vset.pattern.permute.xlu0 0
  %608 = vperm.xlu0 %607, %v572
  %v609 = vpop.permute.xlu0 %608
  %610 = vset.pattern.permute.xlu0 0
  %611 = vperm.xlu0 %610, %v573
  %v612 = vpop.permute.xlu0 %611
  %613 = vset.pattern.permute.xlu0 0
  %614 = vperm.xlu0 %613, %v574
  %v615 = vpop.permute.xlu0 %614
  %616 = vset.pattern.permute.xlu0 0
  %617 = vperm.xlu0 %616, %v575
  %v618 = vpop.permute.xlu0 %617
  %619 = vset.pattern.permute.xlu0 0
  %620 = vperm.xlu0 %619, %v576
  %v621 = vpop.permute.xlu0 %620
  %622 = vset.pattern.permute.xlu0 0
  %623 = vperm.xlu0 %622, %v577
  %v624 = vpop.permute.xlu0 %623
  %625 = vset.pattern.permute.xlu0 0
  %626 = vperm.xlu0 %625, %v578
  %v627 = vpop.permute.xlu0 %626
  %v628 = vperm.slane %v579, 0
  %vm629 = vcmp.eq.s32.totalorder %v582, %v628
  %vm630 = vcmp.eq.s32.totalorder %v585, %v628
  %vm631 = vcmp.eq.s32.totalorder %v588, %v628
  %vm632 = vcmp.eq.s32.totalorder %v591, %v628
  %vm633 = vcmp.eq.s32.totalorder %v594, %v628
  %vm634 = vcmp.eq.s32.totalorder %v597, %v628
  %vm635 = vcmp.eq.s32.totalorder %v600, %v628
  %vm636 = vcmp.eq.s32.totalorder %v603, %v628
  %vm637 = vcmp.eq.s32.totalorder %v606, %v628
  %vm638 = vcmp.eq.s32.totalorder %v609, %v628
  %vm639 = vcmp.eq.s32.totalorder %v612, %v628
  %vm640 = vcmp.eq.s32.totalorder %v615, %v628
  %vm641 = vcmp.eq.s32.totalorder %v618, %v628
  %vm642 = vcmp.eq.s32.totalorder %v621, %v628
  %vm643 = vcmp.eq.s32.totalorder %v624, %v628
  %vm644 = vcmp.eq.s32.totalorder %v627, %v628
  %v645 = vsel %vm629, %v275, 0.0
  %v646 = vsel %vm630, %v276, 0.0
  %v647 = vsel %vm631, %v277, 0.0
  %v648 = vsel %vm632, %v278, 0.0
  %v649 = vsel %vm633, %v279, 0.0
  %v650 = vsel %vm634, %v280, 0.0
  %v651 = vsel %vm635, %v281, 0.0
  %v652 = vsel %vm636, %v282, 0.0
  %v653 = vsel %vm637, %v283, 0.0
  %v654 = vsel %vm638, %v284, 0.0
  %v655 = vsel %vm639, %v285, 0.0
  %v656 = vsel %vm640, %v286, 0.0
  %v657 = vsel %vm641, %v287, 0.0
  %v658 = vsel %vm642, %v288, 0.0
  %v659 = vsel %vm643, %v289, 0.0
  %v660 = vsel %vm644, %v290, 0.0
  %661 = vadd.xlane.f32.xlu0 %v645
  %v662 = vpop.xlane.xlu0 %661
  %663 = vadd.xlane.f32.xlu0 %v646
  %v664 = vpop.xlane.xlu0 %663
  %665 = vadd.xlane.f32.xlu0 %v647
  %v666 = vpop.xlane.xlu0 %665
  %667 = vadd.xlane.f32.xlu0 %v648
  %v668 = vpop.xlane.xlu0 %667
  %669 = vadd.xlane.f32.xlu0 %v649
  %v670 = vpop.xlane.xlu0 %669
  %671 = vadd.xlane.f32.xlu0 %v650
  %v672 = vpop.xlane.xlu0 %671
  %673 = vadd.xlane.f32.xlu0 %v651
  %v674 = vpop.xlane.xlu0 %673
  %675 = vadd.xlane.f32.xlu0 %v652
  %v676 = vpop.xlane.xlu0 %675
  %677 = vadd.xlane.f32.xlu0 %v653
  %v678 = vpop.xlane.xlu0 %677
  %679 = vadd.xlane.f32.xlu0 %v654
  %v680 = vpop.xlane.xlu0 %679
  %681 = vadd.xlane.f32.xlu0 %v655
  %v682 = vpop.xlane.xlu0 %681
  %683 = vadd.xlane.f32.xlu0 %v656
  %v684 = vpop.xlane.xlu0 %683
  %685 = vadd.xlane.f32.xlu0 %v657
  %v686 = vpop.xlane.xlu0 %685
  %687 = vadd.xlane.f32.xlu0 %v658
  %v688 = vpop.xlane.xlu0 %687
  %689 = vadd.xlane.f32.xlu0 %v659
  %v690 = vpop.xlane.xlu0 %689
  %691 = vadd.xlane.f32.xlu0 %v660
  %v692 = vpop.xlane.xlu0 %691
  %v693 = vld [vmem:[#allocation4] sm:$0xff]
  %v694 = vld [vmem:[#allocation4 + $0x8] sm:$0xff]
  %v695 = vld [vmem:[#allocation4 + $0x10] sm:$0xff]
  %v696 = vld [vmem:[#allocation4 + $0x18] sm:$0xff]
  %v697 = vld [vmem:[#allocation4 + $0x20] sm:$0xff]
  %v698 = vld [vmem:[#allocation4 + $0x28] sm:$0xff]
  %v699 = vld [vmem:[#allocation4 + $0x30] sm:$0xff]
  %v700 = vld [vmem:[#allocation4 + $0x38] sm:$0xff]
  %v701 = vld [vmem:[#allocation4 + $0x40] sm:$0xff]
  %v702 = vld [vmem:[#allocation4 + $0x48] sm:$0xff]
  %v703 = vld [vmem:[#allocation4 + $0x50] sm:$0xff]
  %v704 = vld [vmem:[#allocation4 + $0x58] sm:$0xff]
  %v705 = vld [vmem:[#allocation4 + $0x60] sm:$0xff]
  %v706 = vld [vmem:[#allocation4 + $0x68] sm:$0xff]
  %v707 = vld [vmem:[#allocation4 + $0x70] sm:$0xff]
  %v708 = vld [vmem:[#allocation4 + $0x78] sm:$0xff]
  %v709 = vadd.f32 %v693, %v662
  %v710 = vadd.f32 %v694, %v664
  %v711 = vadd.f32 %v695, %v666
  %v712 = vadd.f32 %v696, %v668
  %v713 = vadd.f32 %v697, %v670
  %v714 = vadd.f32 %v698, %v672
  %v715 = vadd.f32 %v699, %v674
  %v716 = vadd.f32 %v700, %v676
  %v717 = vadd.f32 %v701, %v678
  %v718 = vadd.f32 %v702, %v680
  %v719 = vadd.f32 %v703, %v682
  %v720 = vadd.f32 %v704, %v684
  %v721 = vadd.f32 %v705, %v686
  %v722 = vadd.f32 %v706, %v688
  %v723 = vadd.f32 %v707, %v690
  %v724 = vadd.f32 %v708, %v692
  %725 = vst [vmem:[#allocation4] sm:$0xff] %v709
  %726 = vst [vmem:[#allocation4 + $0x8] sm:$0xff] %v710
  %727 = vst [vmem:[#allocation4 + $0x10] sm:$0xff] %v711
  %728 = vst [vmem:[#allocation4 + $0x18] sm:$0xff] %v712
  %729 = vst [vmem:[#allocation4 + $0x20] sm:$0xff] %v713
  %730 = vst [vmem:[#allocation4 + $0x28] sm:$0xff] %v714
  %731 = vst [vmem:[#allocation4 + $0x30] sm:$0xff] %v715
  %732 = vst [vmem:[#allocation4 + $0x38] sm:$0xff] %v716
  %733 = vst [vmem:[#allocation4 + $0x40] sm:$0xff] %v717
  %734 = vst [vmem:[#allocation4 + $0x48] sm:$0xff] %v718
  %735 = vst [vmem:[#allocation4 + $0x50] sm:$0xff] %v719
  %736 = vst [vmem:[#allocation4 + $0x58] sm:$0xff] %v720
  %737 = vst [vmem:[#allocation4 + $0x60] sm:$0xff] %v721
  %738 = vst [vmem:[#allocation4 + $0x68] sm:$0xff] %v722
  %739 = vst [vmem:[#allocation4 + $0x70] sm:$0xff] %v723
  %740 = vst [vmem:[#allocation4 + $0x78] sm:$0xff] %v724
  %s741 = smul.u32 0, 128
  %s742 = smul.u32 0, 128
  %s743 = sadd.s32 %s741, 128
  %p744 = scmp.lt.s32.totalorder %s742, %s743
  %s745 = sadd.s32 %s742, 128
  %p746 = scmp.lt.s32.totalorder %s741, %s745
  %p747 = pnand %p744, %p746
  %p748 = pneg %p747
  // Predicated region
  $region30: #{tpu_custom_call.1} parent=0 // pred_check
    _
  $region31: #{tpu_custom_call.1} parent=0 // pred_check_branch
    %750 = sbr.rel (%p747) target = $region33
  $region32: #{tpu_custom_call.1} parent=0 // pred_region
    %v751 = vlaneseq
    %v752 = vshrl.u32 %v751, 7
    %v753 = vadd.s32 %v752, 8
    %v754 = vadd.s32 %v752, 16
    %v755 = vadd.s32 %v752, 24
    %v756 = vadd.s32 %v752, 32
    %v757 = vadd.s32 %v752, 40
    %v758 = vadd.s32 %v752, 48
    %v759 = vadd.s32 %v752, 56
    %v760 = vadd.s32 %v752, 64
    %v761 = vadd.s32 %v752, 72
    %v762 = vadd.s32 %v752, 80
    %v763 = vadd.s32 %v752, 88
    %v764 = vadd.s32 %v752, 96
    %v765 = vadd.s32 %v752, 104
    %v766 = vadd.s32 %v752, 112
    %v767 = vadd.s32 %v752, 120
    %v768 = vstv %s741
    %v769 = vadd.s32 %v768, %v752
    %v770 = vadd.s32 %v768, %v753
    %v771 = vadd.s32 %v768, %v754
    %v772 = vadd.s32 %v768, %v755
    %v773 = vadd.s32 %v768, %v756
    %v774 = vadd.s32 %v768, %v757
    %v775 = vadd.s32 %v768, %v758
    %v776 = vadd.s32 %v768, %v759
    %v777 = vadd.s32 %v768, %v760
    %v778 = vadd.s32 %v768, %v761
    %v779 = vadd.s32 %v768, %v762
    %v780 = vadd.s32 %v768, %v763
    %v781 = vadd.s32 %v768, %v764
    %v782 = vadd.s32 %v768, %v765
    %v783 = vadd.s32 %v768, %v766
    %v784 = vadd.s32 %v768, %v767
    %v785 = vlaneseq
    %v786 = vand.u32 %v785, 127
    %v787 = vstv %s742
    %v788 = vadd.s32 %v787, %v786
    %vm789 = vcmp.eq.s32.totalorder %v769, %v788
    %vm790 = vcmp.eq.s32.totalorder %v770, %v788
    %vm791 = vcmp.eq.s32.totalorder %v771, %v788
    %vm792 = vcmp.eq.s32.totalorder %v772, %v788
    %vm793 = vcmp.eq.s32.totalorder %v773, %v788
    %vm794 = vcmp.eq.s32.totalorder %v774, %v788
    %vm795 = vcmp.eq.s32.totalorder %v775, %v788
    %vm796 = vcmp.eq.s32.totalorder %v776, %v788
    %vm797 = vcmp.eq.s32.totalorder %v777, %v788
    %vm798 = vcmp.eq.s32.totalorder %v778, %v788
    %vm799 = vcmp.eq.s32.totalorder %v779, %v788
    %vm800 = vcmp.eq.s32.totalorder %v780, %v788
    %vm801 = vcmp.eq.s32.totalorder %v781, %v788
    %vm802 = vcmp.eq.s32.totalorder %v782, %v788
    %vm803 = vcmp.eq.s32.totalorder %v783, %v788
    %vm804 = vcmp.eq.s32.totalorder %v784, %v788
    %v805 = vsel %vm789, %v436, 0.0
    %v806 = vsel %vm790, %v438, 0.0
    %v807 = vsel %vm791, %v440, 0.0
    %v808 = vsel %vm792, %v442, 0.0
    %v809 = vsel %vm793, %v444, 0.0
    %v810 = vsel %vm794, %v446, 0.0
    %v811 = vsel %vm795, %v448, 0.0
    %v812 = vsel %vm796, %v450, 0.0
    %v813 = vsel %vm797, %v452, 0.0
    %v814 = vsel %vm798, %v454, 0.0
    %v815 = vsel %vm799, %v456, 0.0
    %v816 = vsel %vm800, %v458, 0.0
    %v817 = vsel %vm801, %v460, 0.0
    %v818 = vsel %vm802, %v462, 0.0
    %v819 = vsel %vm803, %v464, 0.0
    %v820 = vsel %vm804, %v466, 0.0
    %821 = vadd.xlane.f32.xlu0 %v805
    %v822 = vpop.xlane.xlu0 %821
    %823 = vadd.xlane.f32.xlu0 %v806
    %v824 = vpop.xlane.xlu0 %823
    %825 = vadd.xlane.f32.xlu0 %v807
    %v826 = vpop.xlane.xlu0 %825
    %827 = vadd.xlane.f32.xlu0 %v808
    %v828 = vpop.xlane.xlu0 %827
    %829 = vadd.xlane.f32.xlu0 %v809
    %v830 = vpop.xlane.xlu0 %829
    %831 = vadd.xlane.f32.xlu0 %v810
    %v832 = vpop.xlane.xlu0 %831
    %833 = vadd.xlane.f32.xlu0 %v811
    %v834 = vpop.xlane.xlu0 %833
    %835 = vadd.xlane.f32.xlu0 %v812
    %v836 = vpop.xlane.xlu0 %835
    %837 = vadd.xlane.f32.xlu0 %v813
    %v838 = vpop.xlane.xlu0 %837
    %839 = vadd.xlane.f32.xlu0 %v814
    %v840 = vpop.xlane.xlu0 %839
    %841 = vadd.xlane.f32.xlu0 %v815
    %v842 = vpop.xlane.xlu0 %841
    %843 = vadd.xlane.f32.xlu0 %v816
    %v844 = vpop.xlane.xlu0 %843
    %845 = vadd.xlane.f32.xlu0 %v817
    %v846 = vpop.xlane.xlu0 %845
    %847 = vadd.xlane.f32.xlu0 %v818
    %v848 = vpop.xlane.xlu0 %847
    %849 = vadd.xlane.f32.xlu0 %v819
    %v850 = vpop.xlane.xlu0 %849
    %851 = vadd.xlane.f32.xlu0 %v820
    %v852 = vpop.xlane.xlu0 %851
    %vm853 = vmand %vm789, %vm629
    %vm854 = vmand %vm790, %vm630
    %vm855 = vmand %vm791, %vm631
    %vm856 = vmand %vm792, %vm632
    %vm857 = vmand %vm793, %vm633
    %vm858 = vmand %vm794, %vm634
    %vm859 = vmand %vm795, %vm635
    %vm860 = vmand %vm796, %vm636
    %vm861 = vmand %vm797, %vm637
    %vm862 = vmand %vm798, %vm638
    %vm863 = vmand %vm799, %vm639
    %vm864 = vmand %vm800, %vm640
    %vm865 = vmand %vm801, %vm641
    %vm866 = vmand %vm802, %vm642
    %vm867 = vmand %vm803, %vm643
    %vm868 = vmand %vm804, %vm644
    %v869 = vsel %vm853, %v275, 0.0
    %v870 = vsel %vm854, %v276, 0.0
    %v871 = vsel %vm855, %v277, 0.0
    %v872 = vsel %vm856, %v278, 0.0
    %v873 = vsel %vm857, %v279, 0.0
    %v874 = vsel %vm858, %v280, 0.0
    %v875 = vsel %vm859, %v281, 0.0
    %v876 = vsel %vm860, %v282, 0.0
    %v877 = vsel %vm861, %v283, 0.0
    %v878 = vsel %vm862, %v284, 0.0
    %v879 = vsel %vm863, %v285, 0.0
    %v880 = vsel %vm864, %v286, 0.0
    %v881 = vsel %vm865, %v287, 0.0
    %v882 = vsel %vm866, %v288, 0.0
    %v883 = vsel %vm867, %v289, 0.0
    %v884 = vsel %vm868, %v290, 0.0
    %885 = vadd.xlane.f32.xlu0 %v869
    %v886 = vpop.xlane.xlu0 %885
    %887 = vadd.xlane.f32.xlu0 %v870
    %v888 = vpop.xlane.xlu0 %887
    %889 = vadd.xlane.f32.xlu0 %v871
    %v890 = vpop.xlane.xlu0 %889
    %891 = vadd.xlane.f32.xlu0 %v872
    %v892 = vpop.xlane.xlu0 %891
    %893 = vadd.xlane.f32.xlu0 %v873
    %v894 = vpop.xlane.xlu0 %893
    %895 = vadd.xlane.f32.xlu0 %v874
    %v896 = vpop.xlane.xlu0 %895
    %897 = vadd.xlane.f32.xlu0 %v875
    %v898 = vpop.xlane.xlu0 %897
    %899 = vadd.xlane.f32.xlu0 %v876
    %v900 = vpop.xlane.xlu0 %899
    %901 = vadd.xlane.f32.xlu0 %v877
    %v902 = vpop.xlane.xlu0 %901
    %903 = vadd.xlane.f32.xlu0 %v878
    %v904 = vpop.xlane.xlu0 %903
    %905 = vadd.xlane.f32.xlu0 %v879
    %v906 = vpop.xlane.xlu0 %905
    %907 = vadd.xlane.f32.xlu0 %v880
    %v908 = vpop.xlane.xlu0 %907
    %909 = vadd.xlane.f32.xlu0 %v881
    %v910 = vpop.xlane.xlu0 %909
    %911 = vadd.xlane.f32.xlu0 %v882
    %v912 = vpop.xlane.xlu0 %911
    %913 = vadd.xlane.f32.xlu0 %v883
    %v914 = vpop.xlane.xlu0 %913
    %915 = vadd.xlane.f32.xlu0 %v884
    %v916 = vpop.xlane.xlu0 %915
    %v917 = vld [vmem:[#allocation3] sm:$0xff]
    %v918 = vld [vmem:[#allocation3 + $0x8] sm:$0xff]
    %v919 = vld [vmem:[#allocation3 + $0x10] sm:$0xff]
    %v920 = vld [vmem:[#allocation3 + $0x18] sm:$0xff]
    %v921 = vld [vmem:[#allocation3 + $0x20] sm:$0xff]
    %v922 = vld [vmem:[#allocation3 + $0x28] sm:$0xff]
    %v923 = vld [vmem:[#allocation3 + $0x30] sm:$0xff]
    %v924 = vld [vmem:[#allocation3 + $0x38] sm:$0xff]
    %v925 = vld [vmem:[#allocation3 + $0x40] sm:$0xff]
    %v926 = vld [vmem:[#allocation3 + $0x48] sm:$0xff]
    %v927 = vld [vmem:[#allocation3 + $0x50] sm:$0xff]
    %v928 = vld [vmem:[#allocation3 + $0x58] sm:$0xff]
    %v929 = vld [vmem:[#allocation3 + $0x60] sm:$0xff]
    %v930 = vld [vmem:[#allocation3 + $0x68] sm:$0xff]
    %v931 = vld [vmem:[#allocation3 + $0x70] sm:$0xff]
    %v932 = vld [vmem:[#allocation3 + $0x78] sm:$0xff]
    %v933 = vsub.f32 %v917, %v822
    %v934 = vsub.f32 %v918, %v824
    %v935 = vsub.f32 %v919, %v826
    %v936 = vsub.f32 %v920, %v828
    %v937 = vsub.f32 %v921, %v830
    %v938 = vsub.f32 %v922, %v832
    %v939 = vsub.f32 %v923, %v834
    %v940 = vsub.f32 %v924, %v836
    %v941 = vsub.f32 %v925, %v838
    %v942 = vsub.f32 %v926, %v840
    %v943 = vsub.f32 %v927, %v842
    %v944 = vsub.f32 %v928, %v844
    %v945 = vsub.f32 %v929, %v846
    %v946 = vsub.f32 %v930, %v848
    %v947 = vsub.f32 %v931, %v850
    %v948 = vsub.f32 %v932, %v852
    %949 = vst [vmem:[#allocation3] sm:$0xff] %v933
    %950 = vst [vmem:[#allocation3 + $0x8] sm:$0xff] %v934
    %951 = vst [vmem:[#allocation3 + $0x10] sm:$0xff] %v935
    %952 = vst [vmem:[#allocation3 + $0x18] sm:$0xff] %v936
    %953 = vst [vmem:[#allocation3 + $0x20] sm:$0xff] %v937
    %954 = vst [vmem:[#allocation3 + $0x28] sm:$0xff] %v938
    %955 = vst [vmem:[#allocation3 + $0x30] sm:$0xff] %v939
    %956 = vst [vmem:[#allocation3 + $0x38] sm:$0xff] %v940
    %957 = vst [vmem:[#allocation3 + $0x40] sm:$0xff] %v941
    %958 = vst [vmem:[#allocation3 + $0x48] sm:$0xff] %v942
    %959 = vst [vmem:[#allocation3 + $0x50] sm:$0xff] %v943
    %960 = vst [vmem:[#allocation3 + $0x58] sm:$0xff] %v944
    %961 = vst [vmem:[#allocation3 + $0x60] sm:$0xff] %v945
    %962 = vst [vmem:[#allocation3 + $0x68] sm:$0xff] %v946
    %963 = vst [vmem:[#allocation3 + $0x70] sm:$0xff] %v947
    %964 = vst [vmem:[#allocation3 + $0x78] sm:$0xff] %v948
    %v965 = vld [vmem:[#allocation4] sm:$0xff]
    %v966 = vld [vmem:[#allocation4 + $0x8] sm:$0xff]
    %v967 = vld [vmem:[#allocation4 + $0x10] sm:$0xff]
    %v968 = vld [vmem:[#allocation4 + $0x18] sm:$0xff]
    %v969 = vld [vmem:[#allocation4 + $0x20] sm:$0xff]
    %v970 = vld [vmem:[#allocation4 + $0x28] sm:$0xff]
    %v971 = vld [vmem:[#allocation4 + $0x30] sm:$0xff]
    %v972 = vld [vmem:[#allocation4 + $0x38] sm:$0xff]
    %v973 = vld [vmem:[#allocation4 + $0x40] sm:$0xff]
    %v974 = vld [vmem:[#allocation4 + $0x48] sm:$0xff]
    %v975 = vld [vmem:[#allocation4 + $0x50] sm:$0xff]
    %v976 = vld [vmem:[#allocation4 + $0x58] sm:$0xff]
    %v977 = vld [vmem:[#allocation4 + $0x60] sm:$0xff]
    %v978 = vld [vmem:[#allocation4 + $0x68] sm:$0xff]
    %v979 = vld [vmem:[#allocation4 + $0x70] sm:$0xff]
    %v980 = vld [vmem:[#allocation4 + $0x78] sm:$0xff]
    %v981 = vsub.f32 %v965, %v886
    %v982 = vsub.f32 %v966, %v888
    %v983 = vsub.f32 %v967, %v890
    %v984 = vsub.f32 %v968, %v892
    %v985 = vsub.f32 %v969, %v894
    %v986 = vsub.f32 %v970, %v896
    %v987 = vsub.f32 %v971, %v898
    %v988 = vsub.f32 %v972, %v900
    %v989 = vsub.f32 %v973, %v902
    %v990 = vsub.f32 %v974, %v904
    %v991 = vsub.f32 %v975, %v906
    %v992 = vsub.f32 %v976, %v908
    %v993 = vsub.f32 %v977, %v910
    %v994 = vsub.f32 %v978, %v912
    %v995 = vsub.f32 %v979, %v914
    %v996 = vsub.f32 %v980, %v916
    %997 = vst [vmem:[#allocation4] sm:$0xff] %v981
    %998 = vst [vmem:[#allocation4 + $0x8] sm:$0xff] %v982
    %999 = vst [vmem:[#allocation4 + $0x10] sm:$0xff] %v983
    %1000 = vst [vmem:[#allocation4 + $0x18] sm:$0xff] %v984
    %1001 = vst [vmem:[#allocation4 + $0x20] sm:$0xff] %v985
    %1002 = vst [vmem:[#allocation4 + $0x28] sm:$0xff] %v986
    %1003 = vst [vmem:[#allocation4 + $0x30] sm:$0xff] %v987
    %1004 = vst [vmem:[#allocation4 + $0x38] sm:$0xff] %v988
    %1005 = vst [vmem:[#allocation4 + $0x40] sm:$0xff] %v989
    %1006 = vst [vmem:[#allocation4 + $0x48] sm:$0xff] %v990
    %1007 = vst [vmem:[#allocation4 + $0x50] sm:$0xff] %v991
    %1008 = vst [vmem:[#allocation4 + $0x58] sm:$0xff] %v992
    %1009 = vst [vmem:[#allocation4 + $0x60] sm:$0xff] %v993
    %1010 = vst [vmem:[#allocation4 + $0x68] sm:$0xff] %v994
    %1011 = vst [vmem:[#allocation4 + $0x70] sm:$0xff] %v995
    %1012 = vst [vmem:[#allocation4 + $0x78] sm:$0xff] %v996
  $region33: #{tpu_custom_call.1} parent=0 // pred_fallthru
    _
  // Predicated region
  $region34: #{tpu_custom_call.1} parent=0 // pred_check
    %p1013 = pneg %p23
  $region35: #{tpu_custom_call.1} parent=0 // pred_check_branch
    %1015 = sbr.rel (%p1013) target = $region37
  $region36: #{tpu_custom_call.1} parent=0 // pred_region
    %v1016 = vld [vmem:[%s5] sm:$0xff]
    %v1017 = vld [vmem:[%s5 + $0x8] sm:$0xff]
    %v1018 = vld [vmem:[%s5 + $0x10] sm:$0xff]
    %v1019 = vld [vmem:[%s5 + $0x18] sm:$0xff]
    %v1020 = vld [vmem:[%s5 + $0x20] sm:$0xff]
    %v1021 = vld [vmem:[%s5 + $0x28] sm:$0xff]
    %v1022 = vld [vmem:[%s5 + $0x30] sm:$0xff]
    %v1023 = vld [vmem:[%s5 + $0x38] sm:$0xff]
    %v1024 = vld [vmem:[%s5 + $0x40] sm:$0xff]
    %v1025 = vld [vmem:[%s5 + $0x48] sm:$0xff]
    %v1026 = vld [vmem:[%s5 + $0x50] sm:$0xff]
    %v1027 = vld [vmem:[%s5 + $0x58] sm:$0xff]
    %v1028 = vld [vmem:[%s5 + $0x60] sm:$0xff]
    %v1029 = vld [vmem:[%s5 + $0x68] sm:$0xff]
    %v1030 = vld [vmem:[%s5 + $0x70] sm:$0xff]
    %v1031 = vld [vmem:[%s5 + $0x78] sm:$0xff]
    %v1032 = vld [vmem:[#allocation2] sm:$0xff]
    %v1033 = vld [vmem:[#allocation2 + $0x8] sm:$0xff]
    %v1034 = vld [vmem:[#allocation2 + $0x10] sm:$0xff]
    %v1035 = vld [vmem:[#allocation2 + $0x18] sm:$0xff]
    %v1036 = vld [vmem:[#allocation2 + $0x20] sm:$0xff]
    %v1037 = vld [vmem:[#allocation2 + $0x28] sm:$0xff]
    %v1038 = vld [vmem:[#allocation2 + $0x30] sm:$0xff]
    %v1039 = vld [vmem:[#allocation2 + $0x38] sm:$0xff]
    %v1040 = vld [vmem:[#allocation2 + $0x40] sm:$0xff]
    %v1041 = vld [vmem:[#allocation2 + $0x48] sm:$0xff]
    %v1042 = vld [vmem:[#allocation2 + $0x50] sm:$0xff]
    %v1043 = vld [vmem:[#allocation2 + $0x58] sm:$0xff]
    %v1044 = vld [vmem:[#allocation2 + $0x60] sm:$0xff]
    %v1045 = vld [vmem:[#allocation2 + $0x68] sm:$0xff]
    %v1046 = vld [vmem:[#allocation2 + $0x70] sm:$0xff]
    %v1047 = vld [vmem:[#allocation2 + $0x78] sm:$0xff]
    %v1048 = vld [vmem:[#allocation3] sm:$0xff]
    %v1049 = vld [vmem:[#allocation3 + $0x8] sm:$0xff]
    %v1050 = vld [vmem:[#allocation3 + $0x10] sm:$0xff]
    %v1051 = vld [vmem:[#allocation3 + $0x18] sm:$0xff]
    %v1052 = vld [vmem:[#allocation3 + $0x20] sm:$0xff]
    %v1053 = vld [vmem:[#allocation3 + $0x28] sm:$0xff]
    %v1054 = vld [vmem:[#allocation3 + $0x30] sm:$0xff]
    %v1055 = vld [vmem:[#allocation3 + $0x38] sm:$0xff]
    %v1056 = vld [vmem:[#allocation3 + $0x40] sm:$0xff]
    %v1057 = vld [vmem:[#allocation3 + $0x48] sm:$0xff]
    %v1058 = vld [vmem:[#allocation3 + $0x50] sm:$0xff]
    %v1059 = vld [vmem:[#allocation3 + $0x58] sm:$0xff]
    %v1060 = vld [vmem:[#allocation3 + $0x60] sm:$0xff]
    %v1061 = vld [vmem:[#allocation3 + $0x68] sm:$0xff]
    %v1062 = vld [vmem:[#allocation3 + $0x70] sm:$0xff]
    %v1063 = vld [vmem:[#allocation3 + $0x78] sm:$0xff]
    %v1064 = vld [vmem:[#allocation4] sm:$0xff]
    %v1065 = vld [vmem:[#allocation4 + $0x8] sm:$0xff]
    %v1066 = vld [vmem:[#allocation4 + $0x10] sm:$0xff]
    %v1067 = vld [vmem:[#allocation4 + $0x18] sm:$0xff]
    %v1068 = vld [vmem:[#allocation4 + $0x20] sm:$0xff]
    %v1069 = vld [vmem:[#allocation4 + $0x28] sm:$0xff]
    %v1070 = vld [vmem:[#allocation4 + $0x30] sm:$0xff]
    %v1071 = vld [vmem:[#allocation4 + $0x38] sm:$0xff]
    %v1072 = vld [vmem:[#allocation4 + $0x40] sm:$0xff]
    %v1073 = vld [vmem:[#allocation4 + $0x48] sm:$0xff]
    %v1074 = vld [vmem:[#allocation4 + $0x50] sm:$0xff]
    %v1075 = vld [vmem:[#allocation4 + $0x58] sm:$0xff]
    %v1076 = vld [vmem:[#allocation4 + $0x60] sm:$0xff]
    %v1077 = vld [vmem:[#allocation4 + $0x68] sm:$0xff]
    %v1078 = vld [vmem:[#allocation4 + $0x70] sm:$0xff]
    %v1079 = vld [vmem:[#allocation4 + $0x78] sm:$0xff]
    %v1080 = vadd.f32 %v1048, 1e-12
    %v1081 = vadd.f32 %v1049, 1e-12
    %v1082 = vadd.f32 %v1050, 1e-12
    %v1083 = vadd.f32 %v1051, 1e-12
    %v1084 = vadd.f32 %v1052, 1e-12
    %v1085 = vadd.f32 %v1053, 1e-12
    %v1086 = vadd.f32 %v1054, 1e-12
    %v1087 = vadd.f32 %v1055, 1e-12
    %v1088 = vadd.f32 %v1056, 1e-12
    %v1089 = vadd.f32 %v1057, 1e-12
    %v1090 = vadd.f32 %v1058, 1e-12
    %v1091 = vadd.f32 %v1059, 1e-12
    %v1092 = vadd.f32 %v1060, 1e-12
    %v1093 = vadd.f32 %v1061, 1e-12
    %v1094 = vadd.f32 %v1062, 1e-12
    %v1095 = vadd.f32 %v1063, 1e-12
    %v1096 = vlog2.pop %v1080
    %v1097 = vmul.f32 %v1096, 0.6931472
    %v1098 = vlog2.pop %v1081
    %v1099 = vmul.f32 %v1098, 0.6931472
    %v1100 = vlog2.pop %v1082
    %v1101 = vmul.f32 %v1100, 0.6931472
    %v1102 = vlog2.pop %v1083
    %v1103 = vmul.f32 %v1102, 0.6931472
    %v1104 = vlog2.pop %v1084
    %v1105 = vmul.f32 %v1104, 0.6931472
    %v1106 = vlog2.pop %v1085
    %v1107 = vmul.f32 %v1106, 0.6931472
    %v1108 = vlog2.pop %v1086
    %v1109 = vmul.f32 %v1108, 0.6931472
    %v1110 = vlog2.pop %v1087
    %v1111 = vmul.f32 %v1110, 0.6931472
    %v1112 = vlog2.pop %v1088
    %v1113 = vmul.f32 %v1112, 0.6931472
    %v1114 = vlog2.pop %v1089
    %v1115 = vmul.f32 %v1114, 0.6931472
    %v1116 = vlog2.pop %v1090
    %v1117 = vmul.f32 %v1116, 0.6931472
    %v1118 = vlog2.pop %v1091
    %v1119 = vmul.f32 %v1118, 0.6931472
    %v1120 = vlog2.pop %v1092
    %v1121 = vmul.f32 %v1120, 0.6931472
    %v1122 = vlog2.pop %v1093
    %v1123 = vmul.f32 %v1122, 0.6931472
    %v1124 = vlog2.pop %v1094
    %v1125 = vmul.f32 %v1124, 0.6931472
    %v1126 = vlog2.pop %v1095
    %v1127 = vmul.f32 %v1126, 0.6931472
    %v1128 = vadd.f32 %v1032, %v1097
    %v1129 = vadd.f32 %v1033, %v1099
    %v1130 = vadd.f32 %v1034, %v1101
    %v1131 = vadd.f32 %v1035, %v1103
    %v1132 = vadd.f32 %v1036, %v1105
    %v1133 = vadd.f32 %v1037, %v1107
    %v1134 = vadd.f32 %v1038, %v1109
    %v1135 = vadd.f32 %v1039, %v1111
    %v1136 = vadd.f32 %v1040, %v1113
    %v1137 = vadd.f32 %v1041, %v1115
    %v1138 = vadd.f32 %v1042, %v1117
    %v1139 = vadd.f32 %v1043, %v1119
    %v1140 = vadd.f32 %v1044, %v1121
    %v1141 = vadd.f32 %v1045, %v1123
    %v1142 = vadd.f32 %v1046, %v1125
    %v1143 = vadd.f32 %v1047, %v1127
    %v1144 = vmul.f32 %v1016, %v1128
    %v1145 = vmul.f32 %v1017, %v1129
    %v1146 = vmul.f32 %v1018, %v1130
    %v1147 = vmul.f32 %v1019, %v1131
    %v1148 = vmul.f32 %v1020, %v1132
    %v1149 = vmul.f32 %v1021, %v1133
    %v1150 = vmul.f32 %v1022, %v1134
    %v1151 = vmul.f32 %v1023, %v1135
    %v1152 = vmul.f32 %v1024, %v1136
    %v1153 = vmul.f32 %v1025, %v1137
    %v1154 = vmul.f32 %v1026, %v1138
    %v1155 = vmul.f32 %v1027, %v1139
    %v1156 = vmul.f32 %v1028, %v1140
    %v1157 = vmul.f32 %v1029, %v1141
    %v1158 = vmul.f32 %v1030, %v1142
    %v1159 = vmul.f32 %v1031, %v1143
    %v1160 = vsub.f32 %v1064, %v1144
    %v1161 = vsub.f32 %v1065, %v1145
    %v1162 = vsub.f32 %v1066, %v1146
    %v1163 = vsub.f32 %v1067, %v1147
    %v1164 = vsub.f32 %v1068, %v1148
    %v1165 = vsub.f32 %v1069, %v1149
    %v1166 = vsub.f32 %v1070, %v1150
    %v1167 = vsub.f32 %v1071, %v1151
    %v1168 = vsub.f32 %v1072, %v1152
    %v1169 = vsub.f32 %v1073, %v1153
    %v1170 = vsub.f32 %v1074, %v1154
    %v1171 = vsub.f32 %v1075, %v1155
    %v1172 = vsub.f32 %v1076, %v1156
    %v1173 = vsub.f32 %v1077, %v1157
    %v1174 = vsub.f32 %v1078, %v1158
    %v1175 = vsub.f32 %v1079, %v1159
    %v1176 = vadd.f32 %v1016, 1e-12
    %v1177 = vadd.f32 %v1017, 1e-12
    %v1178 = vadd.f32 %v1018, 1e-12
    %v1179 = vadd.f32 %v1019, 1e-12
    %v1180 = vadd.f32 %v1020, 1e-12
    %v1181 = vadd.f32 %v1021, 1e-12
    %v1182 = vadd.f32 %v1022, 1e-12
    %v1183 = vadd.f32 %v1023, 1e-12
    %v1184 = vadd.f32 %v1024, 1e-12
    %v1185 = vadd.f32 %v1025, 1e-12
    %v1186 = vadd.f32 %v1026, 1e-12
    %v1187 = vadd.f32 %v1027, 1e-12
    %v1188 = vadd.f32 %v1028, 1e-12
    %v1189 = vadd.f32 %v1029, 1e-12
    %v1190 = vadd.f32 %v1030, 1e-12
    %v1191 = vadd.f32 %v1031, 1e-12
    %v1192 = vrcp.pop %v1176
    %v1193 = vmul.f32 %v1176, %v1192
    %v1194 = vsub.f32 1.0, %v1193
    %v1195 = vmul.f32 %v1192, %v1194
    %v1196 = vadd.f32 %v1192, %v1195
    %vm1197 = vweird.f32 %v1176
    %vm1198 = vweird.f32 %v1192
    %vm1199 = vmor %vm1197, %vm1198
    %v1200 = vsel %vm1199, %v1192, %v1196
    %v1201 = vand.u32 2147483647, %v1176
    %vm1202 = vcmp.eq.f32.partialorder %v1201, 8.507059e+37
    %v1203 = vand.u32 %v1176, 2147483648
    %v1204 = vor.u32 1.1754944e-38, %v1203
    %v1205 = vsel %vm1202, %v1204, %v1200
    %v1206 = vmul.f32 %v1160, %v1205
    %v1207 = vrcp.pop %v1177
    %v1208 = vmul.f32 %v1177, %v1207
    %v1209 = vsub.f32 1.0, %v1208
    %v1210 = vmul.f32 %v1207, %v1209
    %v1211 = vadd.f32 %v1207, %v1210
    %vm1212 = vweird.f32 %v1177
    %vm1213 = vweird.f32 %v1207
    %vm1214 = vmor %vm1212, %vm1213
    %v1215 = vsel %vm1214, %v1207, %v1211
    %v1216 = vand.u32 2147483647, %v1177
    %vm1217 = vcmp.eq.f32.partialorder %v1216, 8.507059e+37
    %v1218 = vand.u32 %v1177, 2147483648
    %v1219 = vor.u32 1.1754944e-38, %v1218
    %v1220 = vsel %vm1217, %v1219, %v1215
    %v1221 = vmul.f32 %v1161, %v1220
    %v1222 = vrcp.pop %v1178
    %v1223 = vmul.f32 %v1178, %v1222
    %v1224 = vsub.f32 1.0, %v1223
    %v1225 = vmul.f32 %v1222, %v1224
    %v1226 = vadd.f32 %v1222, %v1225
    %vm1227 = vweird.f32 %v1178
    %vm1228 = vweird.f32 %v1222
    %vm1229 = vmor %vm1227, %vm1228
    %v1230 = vsel %vm1229, %v1222, %v1226
    %v1231 = vand.u32 2147483647, %v1178
    %vm1232 = vcmp.eq.f32.partialorder %v1231, 8.507059e+37
    %v1233 = vand.u32 %v1178, 2147483648
    %v1234 = vor.u32 1.1754944e-38, %v1233
    %v1235 = vsel %vm1232, %v1234, %v1230
    %v1236 = vmul.f32 %v1162, %v1235
    %v1237 = vrcp.pop %v1179
    %v1238 = vmul.f32 %v1179, %v1237
    %v1239 = vsub.f32 1.0, %v1238
    %v1240 = vmul.f32 %v1237, %v1239
    %v1241 = vadd.f32 %v1237, %v1240
    %vm1242 = vweird.f32 %v1179
    %vm1243 = vweird.f32 %v1237
    %vm1244 = vmor %vm1242, %vm1243
    %v1245 = vsel %vm1244, %v1237, %v1241
    %v1246 = vand.u32 2147483647, %v1179
    %vm1247 = vcmp.eq.f32.partialorder %v1246, 8.507059e+37
    %v1248 = vand.u32 %v1179, 2147483648
    %v1249 = vor.u32 1.1754944e-38, %v1248
    %v1250 = vsel %vm1247, %v1249, %v1245
    %v1251 = vmul.f32 %v1163, %v1250
    %v1252 = vrcp.pop %v1180
    %v1253 = vmul.f32 %v1180, %v1252
    %v1254 = vsub.f32 1.0, %v1253
    %v1255 = vmul.f32 %v1252, %v1254
    %v1256 = vadd.f32 %v1252, %v1255
    %vm1257 = vweird.f32 %v1180
    %vm1258 = vweird.f32 %v1252
    %vm1259 = vmor %vm1257, %vm1258
    %v1260 = vsel %vm1259, %v1252, %v1256
    %v1261 = vand.u32 2147483647, %v1180
    %vm1262 = vcmp.eq.f32.partialorder %v1261, 8.507059e+37
    %v1263 = vand.u32 %v1180, 2147483648
    %v1264 = vor.u32 1.1754944e-38, %v1263
    %v1265 = vsel %vm1262, %v1264, %v1260
    %v1266 = vmul.f32 %v1164, %v1265
    %v1267 = vrcp.pop %v1181
    %v1268 = vmul.f32 %v1181, %v1267
    %v1269 = vsub.f32 1.0, %v1268
    %v1270 = vmul.f32 %v1267, %v1269
    %v1271 = vadd.f32 %v1267, %v1270
    %vm1272 = vweird.f32 %v1181
    %vm1273 = vweird.f32 %v1267
    %vm1274 = vmor %vm1272, %vm1273
    %v1275 = vsel %vm1274, %v1267, %v1271
    %v1276 = vand.u32 2147483647, %v1181
    %vm1277 = vcmp.eq.f32.partialorder %v1276, 8.507059e+37
    %v1278 = vand.u32 %v1181, 2147483648
    %v1279 = vor.u32 1.1754944e-38, %v1278
    %v1280 = vsel %vm1277, %v1279, %v1275
    %v1281 = vmul.f32 %v1165, %v1280
    %v1282 = vrcp.pop %v1182
    %v1283 = vmul.f32 %v1182, %v1282
    %v1284 = vsub.f32 1.0, %v1283
    %v1285 = vmul.f32 %v1282, %v1284
    %v1286 = vadd.f32 %v1282, %v1285
    %vm1287 = vweird.f32 %v1182
    %vm1288 = vweird.f32 %v1282
    %vm1289 = vmor %vm1287, %vm1288
    %v1290 = vsel %vm1289, %v1282, %v1286
    %v1291 = vand.u32 2147483647, %v1182
    %vm1292 = vcmp.eq.f32.partialorder %v1291, 8.507059e+37
    %v1293 = vand.u32 %v1182, 2147483648
    %v1294 = vor.u32 1.1754944e-38, %v1293
    %v1295 = vsel %vm1292, %v1294, %v1290
    %v1296 = vmul.f32 %v1166, %v1295
    %v1297 = vrcp.pop %v1183
    %v1298 = vmul.f32 %v1183, %v1297
    %v1299 = vsub.f32 1.0, %v1298
    %v1300 = vmul.f32 %v1297, %v1299
    %v1301 = vadd.f32 %v1297, %v1300
    %vm1302 = vweird.f32 %v1183
    %vm1303 = vweird.f32 %v1297
    %vm1304 = vmor %vm1302, %vm1303
    %v1305 = vsel %vm1304, %v1297, %v1301
    %v1306 = vand.u32 2147483647, %v1183
    %vm1307 = vcmp.eq.f32.partialorder %v1306, 8.507059e+37
    %v1308 = vand.u32 %v1183, 2147483648
    %v1309 = vor.u32 1.1754944e-38, %v1308
    %v1310 = vsel %vm1307, %v1309, %v1305
    %v1311 = vmul.f32 %v1167, %v1310
    %v1312 = vrcp.pop %v1184
    %v1313 = vmul.f32 %v1184, %v1312
    %v1314 = vsub.f32 1.0, %v1313
    %v1315 = vmul.f32 %v1312, %v1314
    %v1316 = vadd.f32 %v1312, %v1315
    %vm1317 = vweird.f32 %v1184
    %vm1318 = vweird.f32 %v1312
    %vm1319 = vmor %vm1317, %vm1318
    %v1320 = vsel %vm1319, %v1312, %v1316
    %v1321 = vand.u32 2147483647, %v1184
    %vm1322 = vcmp.eq.f32.partialorder %v1321, 8.507059e+37
    %v1323 = vand.u32 %v1184, 2147483648
    %v1324 = vor.u32 1.1754944e-38, %v1323
    %v1325 = vsel %vm1322, %v1324, %v1320
    %v1326 = vmul.f32 %v1168, %v1325
    %v1327 = vrcp.pop %v1185
    %v1328 = vmul.f32 %v1185, %v1327
    %v1329 = vsub.f32 1.0, %v1328
    %v1330 = vmul.f32 %v1327, %v1329
    %v1331 = vadd.f32 %v1327, %v1330
    %vm1332 = vweird.f32 %v1185
    %vm1333 = vweird.f32 %v1327
    %vm1334 = vmor %vm1332, %vm1333
    %v1335 = vsel %vm1334, %v1327, %v1331
    %v1336 = vand.u32 2147483647, %v1185
    %vm1337 = vcmp.eq.f32.partialorder %v1336, 8.507059e+37
    %v1338 = vand.u32 %v1185, 2147483648
    %v1339 = vor.u32 1.1754944e-38, %v1338
    %v1340 = vsel %vm1337, %v1339, %v1335
    %v1341 = vmul.f32 %v1169, %v1340
    %v1342 = vrcp.pop %v1186
    %v1343 = vmul.f32 %v1186, %v1342
    %v1344 = vsub.f32 1.0, %v1343
    %v1345 = vmul.f32 %v1342, %v1344
    %v1346 = vadd.f32 %v1342, %v1345
    %vm1347 = vweird.f32 %v1186
    %vm1348 = vweird.f32 %v1342
    %vm1349 = vmor %vm1347, %vm1348
    %v1350 = vsel %vm1349, %v1342, %v1346
    %v1351 = vand.u32 2147483647, %v1186
    %vm1352 = vcmp.eq.f32.partialorder %v1351, 8.507059e+37
    %v1353 = vand.u32 %v1186, 2147483648
    %v1354 = vor.u32 1.1754944e-38, %v1353
    %v1355 = vsel %vm1352, %v1354, %v1350
    %v1356 = vmul.f32 %v1170, %v1355
    %v1357 = vrcp.pop %v1187
    %v1358 = vmul.f32 %v1187, %v1357
    %v1359 = vsub.f32 1.0, %v1358
    %v1360 = vmul.f32 %v1357, %v1359
    %v1361 = vadd.f32 %v1357, %v1360
    %vm1362 = vweird.f32 %v1187
    %vm1363 = vweird.f32 %v1357
    %vm1364 = vmor %vm1362, %vm1363
    %v1365 = vsel %vm1364, %v1357, %v1361
    %v1366 = vand.u32 2147483647, %v1187
    %vm1367 = vcmp.eq.f32.partialorder %v1366, 8.507059e+37
    %v1368 = vand.u32 %v1187, 2147483648
    %v1369 = vor.u32 1.1754944e-38, %v1368
    %v1370 = vsel %vm1367, %v1369, %v1365
    %v1371 = vmul.f32 %v1171, %v1370
    %v1372 = vrcp.pop %v1188
    %v1373 = vmul.f32 %v1188, %v1372
    %v1374 = vsub.f32 1.0, %v1373
    %v1375 = vmul.f32 %v1372, %v1374
    %v1376 = vadd.f32 %v1372, %v1375
    %vm1377 = vweird.f32 %v1188
    %vm1378 = vweird.f32 %v1372
    %vm1379 = vmor %vm1377, %vm1378
    %v1380 = vsel %vm1379, %v1372, %v1376
    %v1381 = vand.u32 2147483647, %v1188
    %vm1382 = vcmp.eq.f32.partialorder %v1381, 8.507059e+37
    %v1383 = vand.u32 %v1188, 2147483648
    %v1384 = vor.u32 1.1754944e-38, %v1383
    %v1385 = vsel %vm1382, %v1384, %v1380
    %v1386 = vmul.f32 %v1172, %v1385
    %v1387 = vrcp.pop %v1189
    %v1388 = vmul.f32 %v1189, %v1387
    %v1389 = vsub.f32 1.0, %v1388
    %v1390 = vmul.f32 %v1387, %v1389
    %v1391 = vadd.f32 %v1387, %v1390
    %vm1392 = vweird.f32 %v1189
    %vm1393 = vweird.f32 %v1387
    %vm1394 = vmor %vm1392, %vm1393
    %v1395 = vsel %vm1394, %v1387, %v1391
    %v1396 = vand.u32 2147483647, %v1189
    %vm1397 = vcmp.eq.f32.partialorder %v1396, 8.507059e+37
    %v1398 = vand.u32 %v1189, 2147483648
    %v1399 = vor.u32 1.1754944e-38, %v1398
    %v1400 = vsel %vm1397, %v1399, %v1395
    %v1401 = vmul.f32 %v1173, %v1400
    %v1402 = vrcp.pop %v1190
    %v1403 = vmul.f32 %v1190, %v1402
    %v1404 = vsub.f32 1.0, %v1403
    %v1405 = vmul.f32 %v1402, %v1404
    %v1406 = vadd.f32 %v1402, %v1405
    %vm1407 = vweird.f32 %v1190
    %vm1408 = vweird.f32 %v1402
    %vm1409 = vmor %vm1407, %vm1408
    %v1410 = vsel %vm1409, %v1402, %v1406
    %v1411 = vand.u32 2147483647, %v1190
    %vm1412 = vcmp.eq.f32.partialorder %v1411, 8.507059e+37
    %v1413 = vand.u32 %v1190, 2147483648
    %v1414 = vor.u32 1.1754944e-38, %v1413
    %v1415 = vsel %vm1412, %v1414, %v1410
    %v1416 = vmul.f32 %v1174, %v1415
    %v1417 = vrcp.pop %v1191
    %v1418 = vmul.f32 %v1191, %v1417
    %v1419 = vsub.f32 1.0, %v1418
    %v1420 = vmul.f32 %v1417, %v1419
    %v1421 = vadd.f32 %v1417, %v1420
    %vm1422 = vweird.f32 %v1191
    %vm1423 = vweird.f32 %v1417
    %vm1424 = vmor %vm1422, %vm1423
    %v1425 = vsel %vm1424, %v1417, %v1421
    %v1426 = vand.u32 2147483647, %v1191
    %vm1427 = vcmp.eq.f32.partialorder %v1426, 8.507059e+37
    %v1428 = vand.u32 %v1191, 2147483648
    %v1429 = vor.u32 1.1754944e-38, %v1428
    %v1430 = vsel %vm1427, %v1429, %v1425
    %v1431 = vmul.f32 %v1175, %v1430
    %v1432 = vlaneseq
    %v1433 = vshrl.u32 %v1432, 7
    %v1434 = vadd.s32 %v1433, 8
    %v1435 = vadd.s32 %v1433, 16
    %v1436 = vadd.s32 %v1433, 24
    %v1437 = vadd.s32 %v1433, 32
    %v1438 = vadd.s32 %v1433, 40
    %v1439 = vadd.s32 %v1433, 48
    %v1440 = vadd.s32 %v1433, 56
    %v1441 = vadd.s32 %v1433, 64
    %v1442 = vadd.s32 %v1433, 72
    %v1443 = vadd.s32 %v1433, 80
    %v1444 = vadd.s32 %v1433, 88
    %v1445 = vadd.s32 %v1433, 96
    %v1446 = vadd.s32 %v1433, 104
    %v1447 = vadd.s32 %v1433, 112
    %v1448 = vadd.s32 %v1433, 120
    %v1449 = vstv %s741
    %v1450 = vadd.s32 %v1449, %v1433
    %v1451 = vadd.s32 %v1449, %v1434
    %v1452 = vadd.s32 %v1449, %v1435
    %v1453 = vadd.s32 %v1449, %v1436
    %v1454 = vadd.s32 %v1449, %v1437
    %v1455 = vadd.s32 %v1449, %v1438
    %v1456 = vadd.s32 %v1449, %v1439
    %v1457 = vadd.s32 %v1449, %v1440
    %v1458 = vadd.s32 %v1449, %v1441
    %v1459 = vadd.s32 %v1449, %v1442
    %v1460 = vadd.s32 %v1449, %v1443
    %v1461 = vadd.s32 %v1449, %v1444
    %v1462 = vadd.s32 %v1449, %v1445
    %v1463 = vadd.s32 %v1449, %v1446
    %v1464 = vadd.s32 %v1449, %v1447
    %v1465 = vadd.s32 %v1449, %v1448
    %vm1466 = vcmp.lt.s32.totalorder %v1450, 8
    %vm1467 = vcmp.lt.s32.totalorder %v1451, 8
    %vm1468 = vcmp.lt.s32.totalorder %v1452, 8
    %vm1469 = vcmp.lt.s32.totalorder %v1453, 8
    %vm1470 = vcmp.lt.s32.totalorder %v1454, 8
    %vm1471 = vcmp.lt.s32.totalorder %v1455, 8
    %vm1472 = vcmp.lt.s32.totalorder %v1456, 8
    %vm1473 = vcmp.lt.s32.totalorder %v1457, 8
    %vm1474 = vcmp.lt.s32.totalorder %v1458, 8
    %vm1475 = vcmp.lt.s32.totalorder %v1459, 8
    %vm1476 = vcmp.lt.s32.totalorder %v1460, 8
    %vm1477 = vcmp.lt.s32.totalorder %v1461, 8
    %vm1478 = vcmp.lt.s32.totalorder %v1462, 8
    %vm1479 = vcmp.lt.s32.totalorder %v1463, 8
    %vm1480 = vcmp.lt.s32.totalorder %v1464, 8
    %vm1481 = vcmp.lt.s32.totalorder %v1465, 8
    %v1482 = vmul.f32 %v1206, -1.0
    %v1483 = vmul.f32 %v1221, -1.0
    %v1484 = vmul.f32 %v1236, -1.0
    %v1485 = vmul.f32 %v1251, -1.0
    %v1486 = vmul.f32 %v1266, -1.0
    %v1487 = vmul.f32 %v1281, -1.0
    %v1488 = vmul.f32 %v1296, -1.0
    %v1489 = vmul.f32 %v1311, -1.0
    %v1490 = vmul.f32 %v1326, -1.0
    %v1491 = vmul.f32 %v1341, -1.0
    %v1492 = vmul.f32 %v1356, -1.0
    %v1493 = vmul.f32 %v1371, -1.0
    %v1494 = vmul.f32 %v1386, -1.0
    %v1495 = vmul.f32 %v1401, -1.0
    %v1496 = vmul.f32 %v1416, -1.0
    %v1497 = vmul.f32 %v1431, -1.0
    %v1498 = vsel %vm1466, %v1482, 0.0
    %v1499 = vsel %vm1467, %v1483, 0.0
    %v1500 = vsel %vm1468, %v1484, 0.0
    %v1501 = vsel %vm1469, %v1485, 0.0
    %v1502 = vsel %vm1470, %v1486, 0.0
    %v1503 = vsel %vm1471, %v1487, 0.0
    %v1504 = vsel %vm1472, %v1488, 0.0
    %v1505 = vsel %vm1473, %v1489, 0.0
    %v1506 = vsel %vm1474, %v1490, 0.0
    %v1507 = vsel %vm1475, %v1491, 0.0
    %v1508 = vsel %vm1476, %v1492, 0.0
    %v1509 = vsel %vm1477, %v1493, 0.0
    %v1510 = vsel %vm1478, %v1494, 0.0
    %v1511 = vsel %vm1479, %v1495, 0.0
    %v1512 = vsel %vm1480, %v1496, 0.0
    %v1513 = vsel %vm1481, %v1497, 0.0
    %vm1514 = vcmask 7168
    %1515 = vst.msk [vmem:[%s6] sm:$0xff] %vm1514, %v1498
    %1516 = vst.msk [vmem:[%s6 + $0x8] sm:$0xff] %vm1514, %v1499
    %1517 = vst.msk [vmem:[%s6 + $0x10] sm:$0xff] %vm1514, %v1500
    %1518 = vst.msk [vmem:[%s6 + $0x18] sm:$0xff] %vm1514, %v1501
    %1519 = vst.msk [vmem:[%s6 + $0x20] sm:$0xff] %vm1514, %v1502
    %1520 = vst.msk [vmem:[%s6 + $0x28] sm:$0xff] %vm1514, %v1503
    %1521 = vst.msk [vmem:[%s6 + $0x30] sm:$0xff] %vm1514, %v1504
    %1522 = vst.msk [vmem:[%s6 + $0x38] sm:$0xff] %vm1514, %v1505
    %1523 = vst.msk [vmem:[%s6 + $0x40] sm:$0xff] %vm1514, %v1506
    %1524 = vst.msk [vmem:[%s6 + $0x48] sm:$0xff] %vm1514, %v1507
    %1525 = vst.msk [vmem:[%s6 + $0x50] sm:$0xff] %vm1514, %v1508
    %1526 = vst.msk [vmem:[%s6 + $0x58] sm:$0xff] %vm1514, %v1509
    %1527 = vst.msk [vmem:[%s6 + $0x60] sm:$0xff] %vm1514, %v1510
    %1528 = vst.msk [vmem:[%s6 + $0x68] sm:$0xff] %vm1514, %v1511
    %1529 = vst.msk [vmem:[%s6 + $0x70] sm:$0xff] %vm1514, %v1512
    %1530 = vst.msk [vmem:[%s6 + $0x78] sm:$0xff] %vm1514, %v1513
  $region37: #{tpu_custom_call.1} parent=0 // pred_fallthru
    _
  // Predicated region
  $region38: #{tpu_custom_call.1} parent=0 // pred_check
    _
  $region39: #{tpu_custom_call.1} parent=0 // pred_check_branch
    %1532 = sbr.rel (0) target = $region41
  $region40: #{tpu_custom_call.1} parent=0 // pred_region
    _
  $region41: #{tpu_custom_call.1} parent=0 // pred_fallthru
    _
  // Predicated region
  $region42: #{tpu_custom_call.1} parent=0 // pred_check
    _
  $region43: #{tpu_custom_call.1} parent=0 // pred_check_branch
    %1534 = sbr.rel (0) target = $region45
  $region44: #{tpu_custom_call.1} parent=0 // pred_region
    _
  $region45: #{tpu_custom_call.1} parent=0 // pred_fallthru
    _

</llo_original>
